<compile_context>
chip_gen: v7x
topology: tpu7x:2x2x1
jax: 0.10.0
libtpu: 0.0.40
codegen_flags: <defaults>
</compile_context>

<pallas_src>
import jax
import jax.numpy as jnp
import numpy as np
from jax.experimental import pallas as pl
from jax.experimental.pallas import tpu as pltpu


def edge_mlp_kernel(node_ref, nodef_ref, e_ref, eT_ref,
                    wea_ref, web_ref, ws_ref, wt_ref, w1_ref,
                    bh_ref, bo_ref, out_ref):
    bt, n, l_e = e_ref.shape                 # l_e = N * d_edge (lane-dense)
    d_node = node_ref.shape[-1]
    l_h = wea_ref.shape[-1]                  # l_h = N * d_hid  (lane-dense)
    cdt = wea_ref.dtype                      # compute dtype (bf16)

    # lin0_e without concatenation: e @ blockdiag(W_ea) + e^T @ blockdiag(W_eb).
    # The big edge tensor arrives at its native dtype and is cast in-kernel.
    e = e_ref[...].astype(cdt).reshape(bt * n, l_e)
    et = eT_ref[...].reshape(bt * n, l_e)    # pre-transposed, already bf16
    h = (jnp.dot(e, wea_ref[...], preferred_element_type=jnp.float32)
         + jnp.dot(et, web_ref[...], preferred_element_type=jnp.float32))

    # lin0_s: the broadcast over the target axis is folded into the lane-tiled
    # weight, so s comes out already lane-dense and row-aligned with h.
    node = node_ref[...].astype(cdt).reshape(bt * n, d_node)
    h = h + jnp.dot(node, ws_ref[...], preferred_element_type=jnp.float32)

    # lin0_t: one lane-dense row per batch element (block-diagonal weight on
    # the flattened node features), broadcast over the N source rows.
    nodef = nodef_ref[...].astype(cdt).reshape(bt, -1)       # (bt, N*d_node)
    t = jnp.dot(nodef, wt_ref[...], preferred_element_type=jnp.float32)

    # Folded bias (b_e + b_s + b_t, lane-tiled) + ReLU.
    h = h.reshape(bt, n, l_h) + t[:, None, :] + bh_ref[...]
    h = jnp.maximum(h, 0.0)

    # lin1 (block-diagonal, lane-dense output) + bias; store unmasked
    # full-lane vregs.
    out = jnp.dot(h.reshape(bt * n, l_h).astype(cdt), w1_ref[...],
                  preferred_element_type=jnp.float32) + bo_ref[...]
    out_ref[...] = out.reshape(bt, n, l_e).astype(out_ref.dtype)


def _vmem_limit_bytes(default=64 * 1024 * 1024):
    """Generation-aware scoped-VMEM limit: ~75% of physical per-core VMEM
    (≈96 MiB on v5e/v6e, ≈48 MiB on v7x); conservative fallback otherwise."""
    try:
        cap = getattr(pltpu.get_tpu_info(), "vmem_capacity_bytes", None)
        if cap:
            return int(cap) * 3 // 4
    except Exception:
        pass
    return default


def _pick_batch_block(B, N, d_edge, d_hid, *, in_bytes, out_bytes,
                      budget_bytes, max_bt=16, min_grid=1):
    """Largest divisor of B whose per-step working set fits the budget, while
    keeping at least `min_grid` grid steps (so both v7x TensorCores get work)."""
    nn = N * N
    per_batch = (
        nn * d_edge * (2 * in_bytes        # edge input tile (2-deep pipeline)
                       + 2 * 2             # e^T input tile (bf16, 2-deep)
                       + 2 * out_bytes     # output tile (2-deep)
                       + 2                 # in-kernel bf16 copy of e
                       + 4)                # f32 result before the output cast
        + nn * d_hid * (4 + 4 + 2)         # h (f32), s (f32), bf16 cast of h
    )
    bt = max(1, min(B, max_bt, budget_bytes // max(per_batch, 1)))
    if min_grid > 1:
        bt = min(bt, max(1, B // min_grid))
    while B % bt:
        bt -= 1
    return bt


def edge_mlp(node_features, edge_features, params, *,
             compute_dtype=jnp.bfloat16, out_dtype=None, batch_block=None):
    """node_features: (B, N, d_node); edge_features: (B, N, N, d_edge)."""
    B, N, d_node = node_features.shape
    d_edge = edge_features.shape[-1]
    w_e, b_e, w_s, b_s, w_t, b_t, w_1, b_1 = params
    d_hid = w_e.shape[1]
    out_dtype = out_dtype or edge_features.dtype

    l_e, l_h = N * d_edge, N * d_hid

    # ---- wrapper-side weight plumbing (tiny, block-diagonal expansion) -----
    eye = jnp.eye(N, dtype=jnp.float32)
    w_ea_bd = jnp.kron(eye, w_e[:d_edge]).astype(compute_dtype)   # (l_e, l_h)
    w_eb_bd = jnp.kron(eye, w_e[d_edge:]).astype(compute_dtype)   # (l_e, l_h)
    w_s_rep = jnp.tile(w_s, (1, N)).astype(compute_dtype)         # (d_node, l_h)
    w_t_bd = jnp.kron(eye, w_t).astype(compute_dtype)             # (N*d_node, l_h)
    w_1_bd = jnp.kron(eye, w_1).astype(compute_dtype)             # (l_h, l_e)
    b_hid = jnp.tile((b_e + b_s + b_t).astype(jnp.float32), (1, N))   # (1, l_h)
    b_out = jnp.tile(b_1.astype(jnp.float32), (1, N))                 # (1, l_e)

    # ---- input presentation (lane-dense views) ------------------------------
    e_dense = edge_features.reshape(B, N, l_e)            # free (contiguous)
    # Pre-transposed e^T copy replaces the in-kernel XLU transpose; the bf16
    # cast fuses into the same XLA transpose op under jit.
    eT_dense = (jnp.swapaxes(edge_features, 1, 2)
                .astype(compute_dtype).reshape(B, N, l_e))
    node = node_features                                   # native dtype
    node_flat = node_features.reshape(B, 1, N * d_node)    # free (contiguous)

    vmem_limit = _vmem_limit_bytes()
    bt = batch_block or _pick_batch_block(
        B, N, d_edge, d_hid,
        in_bytes=edge_features.dtype.itemsize,
        out_bytes=jnp.dtype(out_dtype).itemsize,
        budget_bytes=vmem_limit // 2,
        min_grid=2 if B >= 2 else 1)
    grid = (B // bt,)

    def full(a):
        return pl.BlockSpec(a.shape, lambda b, nd=a.ndim: (0,) * nd)

    grid_spec = pltpu.PrefetchScalarGridSpec(
        num_scalar_prefetch=0,
        grid=grid,
        in_specs=[
            pl.BlockSpec((bt, N, d_node), lambda b: (b, 0, 0)),
            pl.BlockSpec((bt, 1, N * d_node), lambda b: (b, 0, 0)),
            pl.BlockSpec((bt, N, l_e), lambda b: (b, 0, 0)),
            pl.BlockSpec((bt, N, l_e), lambda b: (b, 0, 0)),
            full(w_ea_bd), full(w_eb_bd), full(w_s_rep), full(w_t_bd),
            full(w_1_bd), full(b_hid), full(b_out),
        ],
        out_specs=pl.BlockSpec((bt, N, l_e), lambda b: (b, 0, 0)),
    )

    flops = (2 * 2 * B * N * l_e * l_h        # lin0_e (two lane-dense halves)
             + 2 * B * N * d_node * l_h       # lin0_s
             + 2 * B * N * d_node * l_h       # lin0_t
             + 2 * B * N * l_h * l_e)         # lin1
    bytes_accessed = (
        B * N * l_e * (edge_features.dtype.itemsize + 2
                       + jnp.dtype(out_dtype).itemsize)
        + 2 * B * N * d_node * node_features.dtype.itemsize
        + (2 * l_e * l_h + d_node * l_h + N * d_node * l_h + l_h * l_e)
        * jnp.dtype(compute_dtype).itemsize
        + (l_h + l_e) * 4)

    out = pl.pallas_call(
        edge_mlp_kernel,
        out_shape=jax.ShapeDtypeStruct((B, N, l_e), out_dtype),
        grid_spec=grid_spec,
        compiler_params=pltpu.CompilerParams(
            dimension_semantics=("parallel",),
            vmem_limit_bytes=int(vmem_limit),
        ),
        cost_estimate=pl.CostEstimate(flops=int(flops), transcendentals=0,
                                      bytes_accessed=int(bytes_accessed)),
    )(node, node_flat, e_dense, eT_dense,
      w_ea_bd, w_eb_bd, w_s_rep, w_t_bd, w_1_bd, b_hid, b_out)

    return out.reshape(B, N, N, d_edge)       # free (contiguous) reshape


def xavier_uniform(key, fan_in, fan_out, dtype=jnp.float32):
    # Matches nn.init.xavier_uniform_ on an (out, in) weight; stored (in, out).
    bound = float(np.sqrt(6.0 / (fan_in + fan_out)))
    return jax.random.uniform(key, (fan_in, fan_out), dtype, -bound, bound)


def init_params(key, d_node, d_edge, d_edge_hid):
    k_e, k_s, k_t, k_1 = jax.random.split(key, 4)
    w_e = xavier_uniform(k_e, 2 * d_edge, d_edge_hid)
    w_s = xavier_uniform(k_s, d_node, d_edge_hid)
    w_t = xavier_uniform(k_t, d_node, d_edge_hid)
    w_1 = xavier_uniform(k_1, d_edge_hid, d_edge)
    b_e = jnp.zeros((1, d_edge_hid), jnp.float32)
    b_s = jnp.zeros((1, d_edge_hid), jnp.float32)
    b_t = jnp.zeros((1, d_edge_hid), jnp.float32)
    b_1 = jnp.zeros((1, d_edge), jnp.float32)
    return (w_e, b_e, w_s, b_s, w_t, b_t, w_1, b_1)


def edge_mlp_ref(node_features, edge_features, params):
    """Pure-JAX f32 reference matching the PyTorch module (ReLU, eval-mode)."""
    w_e, b_e, w_s, b_s, w_t, b_t, w_1, b_1 = params
    s = jnp.einsum('bnd,dh->bnh', node_features, w_s) + b_s[0]
    t = jnp.einsum('bnd,dh->bnh', node_features, w_t) + b_t[0]
    e_cat = jnp.concatenate(
        [edge_features, jnp.transpose(edge_features, (0, 2, 1, 3))], axis=-1)
    e0 = jnp.einsum('bnmd,dh->bnmh', e_cat, w_e) + b_e[0]
    h = e0 + s[:, :, None, :] + t[:, None, :, :]
    h = jnp.maximum(h, 0.0)
    return jnp.einsum('bnmh,hd->bnmd', h, w_1) + b_1[0]


if __name__ == "__main__":
    B, N = 2, 8
    d_node, d_edge, d_edge_hid = 32, 16, 32

    key = jax.random.PRNGKey(0)
    k_node, k_edge, k_param = jax.random.split(key, 3)
    node_features = jax.random.normal(k_node, (B, N, d_node), jnp.float32)
    edge_features = jax.random.normal(k_edge, (B, N, N, d_edge), jnp.float32)
    params = init_params(k_param, d_node, d_edge, d_edge_hid)

    fwd = jax.jit(edge_mlp)
    out = jax.block_until_ready(fwd(node_features, edge_features, params))

    ref = edge_mlp_ref(node_features, edge_features, params)
    # Kernel uses bf16 MXU operands with f32 accumulation, so compare against
    # the f32 reference with a bf16-appropriate tolerance.
    np.testing.assert_allclose(np.asarray(out), np.asarray(ref),
                               rtol=3e-2, atol=3e-2)
    print("KERNEL_OK")
</pallas_src>

<mosaic_0001>
module attributes {stable_mosaic.version = 11 : i64} {
  func.func @edge_mlp_kernel(%arg0: i32, %arg1: memref<1x8x32xf32, #tpu.memory_space<vmem>>, %arg2: memref<1x1x256xf32, #tpu.memory_space<vmem>>, %arg3: memref<1x8x128xf32, #tpu.memory_space<vmem>>, %arg4: memref<1x8x128xbf16, #tpu.memory_space<vmem>>, %arg5: memref<128x256xbf16, #tpu.memory_space<vmem>>, %arg6: memref<128x256xbf16, #tpu.memory_space<vmem>>, %arg7: memref<32x256xbf16, #tpu.memory_space<vmem>>, %arg8: memref<256x256xbf16, #tpu.memory_space<vmem>>, %arg9: memref<256x128xbf16, #tpu.memory_space<vmem>>, %arg10: memref<1x256xf32, #tpu.memory_space<vmem>>, %arg11: memref<1x128xf32, #tpu.memory_space<vmem>>, %arg12: memref<1x8x128xf32, #tpu.memory_space<vmem>>) attributes {dimension_semantics = [#tpu.dimension_semantics<parallel>], iteration_bounds = array<i64: 2>, scalar_prefetch = 0 : i64, scratch_operands = 0 : i64, tpu.core_type = #tpu.core_type<tc>, window_params = [{transform_indices = @transform_0, window_bounds = array<i64: 1, 8, 32>}, {transform_indices = @transform_1, window_bounds = array<i64: 1, 1, 256>}, {transform_indices = @transform_2, window_bounds = array<i64: 1, 8, 128>}, {transform_indices = @transform_3, window_bounds = array<i64: 1, 8, 128>}, {pipeline_mode = #tpu.pipeline_mode<synchronous>, transform_indices = @transform_4, window_bounds = array<i64: 128, 256>}, {pipeline_mode = #tpu.pipeline_mode<synchronous>, transform_indices = @transform_5, window_bounds = array<i64: 128, 256>}, {pipeline_mode = #tpu.pipeline_mode<synchronous>, transform_indices = @transform_6, window_bounds = array<i64: 32, 256>}, {pipeline_mode = #tpu.pipeline_mode<synchronous>, transform_indices = @transform_7, window_bounds = array<i64: 256, 256>}, {pipeline_mode = #tpu.pipeline_mode<synchronous>, transform_indices = @transform_8, window_bounds = array<i64: 256, 128>}, {pipeline_mode = #tpu.pipeline_mode<synchronous>, transform_indices = @transform_9, window_bounds = array<i64: 1, 256>}, {pipeline_mode = #tpu.pipeline_mode<synchronous>, transform_indices = @transform_10, window_bounds = array<i64: 1, 128>}, {transform_indices = @transform_11, window_bounds = array<i64: 1, 8, 128>}]} {
    %c0 = arith.constant 0 : index
    %c0_0 = arith.constant 0 : index
    %c0_1 = arith.constant 0 : index
    %0 = vector.load %arg3[%c0, %c0_0, %c0_1] : memref<1x8x128xf32, #tpu.memory_space<vmem>>, vector<1x8x128xf32>
    %1 = arith.truncf %0 : vector<1x8x128xf32> to vector<1x8x128xbf16>
    %2 = vector.shape_cast %1 : vector<1x8x128xbf16> to vector<8x128xbf16>
    %c0_2 = arith.constant 0 : index
    %c0_3 = arith.constant 0 : index
    %c0_4 = arith.constant 0 : index
    %3 = vector.load %arg4[%c0_2, %c0_3, %c0_4] : memref<1x8x128xbf16, #tpu.memory_space<vmem>>, vector<1x8x128xbf16>
    %4 = vector.shape_cast %3 : vector<1x8x128xbf16> to vector<8x128xbf16>
    %c0_5 = arith.constant 0 : index
    %c0_6 = arith.constant 0 : index
    %5 = vector.load %arg5[%c0_5, %c0_6] : memref<128x256xbf16, #tpu.memory_space<vmem>>, vector<128x256xbf16>
    %cst = arith.constant dense<0.000000e+00> : vector<8x256xf32>
    %6 = tpu.matmul %2, %5, %cst {dimension_numbers = #tpu.dot_dimension_numbers<[1], [0], [0], [1], [0, 0, 1, 1], [], []>} : vector<8x128xbf16>, vector<128x256xbf16>, vector<8x256xf32> -> vector<8x256xf32>
    %c0_7 = arith.constant 0 : index
    %c0_8 = arith.constant 0 : index
    %7 = vector.load %arg6[%c0_7, %c0_8] : memref<128x256xbf16, #tpu.memory_space<vmem>>, vector<128x256xbf16>
    %cst_9 = arith.constant dense<0.000000e+00> : vector<8x256xf32>
    %8 = tpu.matmul %4, %7, %cst_9 {dimension_numbers = #tpu.dot_dimension_numbers<[1], [0], [0], [1], [0, 0, 1, 1], [], []>} : vector<8x128xbf16>, vector<128x256xbf16>, vector<8x256xf32> -> vector<8x256xf32>
    %9 = arith.addf %6, %8 : vector<8x256xf32>
    %c0_10 = arith.constant 0 : index
    %c0_11 = arith.constant 0 : index
    %c0_12 = arith.constant 0 : index
    %10 = vector.load %arg1[%c0_10, %c0_11, %c0_12] : memref<1x8x32xf32, #tpu.memory_space<vmem>>, vector<1x8x32xf32>
    %11 = arith.truncf %10 : vector<1x8x32xf32> to vector<1x8x32xbf16>
    %12 = vector.shape_cast %11 : vector<1x8x32xbf16> to vector<8x32xbf16>
    %c0_13 = arith.constant 0 : index
    %c0_14 = arith.constant 0 : index
    %13 = vector.load %arg7[%c0_13, %c0_14] : memref<32x256xbf16, #tpu.memory_space<vmem>>, vector<32x256xbf16>
    %cst_15 = arith.constant dense<0.000000e+00> : vector<8x256xf32>
    %14 = tpu.matmul %12, %13, %cst_15 {dimension_numbers = #tpu.dot_dimension_numbers<[1], [0], [0], [1], [0, 0, 1, 1], [], []>} : vector<8x32xbf16>, vector<32x256xbf16>, vector<8x256xf32> -> vector<8x256xf32>
    %15 = arith.addf %9, %14 : vector<8x256xf32>
    %c0_16 = arith.constant 0 : index
    %c0_17 = arith.constant 0 : index
    %c0_18 = arith.constant 0 : index
    %16 = vector.load %arg2[%c0_16, %c0_17, %c0_18] : memref<1x1x256xf32, #tpu.memory_space<vmem>>, vector<1x1x256xf32>
    %17 = arith.truncf %16 : vector<1x1x256xf32> to vector<1x1x256xbf16>
    %18 = vector.shape_cast %17 : vector<1x1x256xbf16> to vector<1x256xbf16>
    %c0_19 = arith.constant 0 : index
    %c0_20 = arith.constant 0 : index
    %19 = vector.load %arg8[%c0_19, %c0_20] : memref<256x256xbf16, #tpu.memory_space<vmem>>, vector<256x256xbf16>
    %cst_21 = arith.constant dense<0.000000e+00> : vector<1x256xf32>
    %20 = tpu.matmul %18, %19, %cst_21 {dimension_numbers = #tpu.dot_dimension_numbers<[1], [0], [0], [1], [0, 0, 1, 1], [], []>} : vector<1x256xbf16>, vector<256x256xbf16>, vector<1x256xf32> -> vector<1x256xf32>
    %21 = vector.shape_cast %15 : vector<8x256xf32> to vector<1x8x256xf32>
    %22 = vector.shape_cast %20 : vector<1x256xf32> to vector<1x1x256xf32>
    %23 = vector.broadcast %22 : vector<1x1x256xf32> to vector<1x8x256xf32>
    %24 = arith.addf %21, %23 : vector<1x8x256xf32>
    %c0_22 = arith.constant 0 : index
    %c0_23 = arith.constant 0 : index
    %25 = vector.load %arg10[%c0_22, %c0_23] : memref<1x256xf32, #tpu.memory_space<vmem>>, vector<1x256xf32>
    %26 = vector.shape_cast %25 : vector<1x256xf32> to vector<1x1x256xf32>
    %27 = vector.broadcast %26 : vector<1x1x256xf32> to vector<1x8x256xf32>
    %28 = arith.addf %24, %27 : vector<1x8x256xf32>
    %cst_24 = arith.constant 0.000000e+00 : f32
    %29 = vector.broadcast %cst_24 : f32 to vector<1x8x256xf32>
    %30 = arith.maximumf %28, %29 : vector<1x8x256xf32>
    %31 = vector.shape_cast %30 : vector<1x8x256xf32> to vector<8x256xf32>
    %32 = arith.truncf %31 : vector<8x256xf32> to vector<8x256xbf16>
    %c0_25 = arith.constant 0 : index
    %c0_26 = arith.constant 0 : index
    %33 = vector.load %arg9[%c0_25, %c0_26] : memref<256x128xbf16, #tpu.memory_space<vmem>>, vector<256x128xbf16>
    %cst_27 = arith.constant dense<0.000000e+00> : vector<8x128xf32>
    %34 = tpu.matmul %32, %33, %cst_27 {dimension_numbers = #tpu.dot_dimension_numbers<[1], [0], [0], [1], [0, 0, 1, 1], [], []>} : vector<8x256xbf16>, vector<256x128xbf16>, vector<8x128xf32> -> vector<8x128xf32>
    %c0_28 = arith.constant 0 : index
    %c0_29 = arith.constant 0 : index
    %35 = vector.load %arg11[%c0_28, %c0_29] : memref<1x128xf32, #tpu.memory_space<vmem>>, vector<1x128xf32>
    %36 = vector.broadcast %35 : vector<1x128xf32> to vector<8x128xf32>
    %37 = arith.addf %34, %36 : vector<8x128xf32>
    %38 = vector.shape_cast %37 : vector<8x128xf32> to vector<1x8x128xf32>
    %c0_30 = arith.constant 0 : index
    %c0_31 = arith.constant 0 : index
    %c0_32 = arith.constant 0 : index
    %39 = vector.load %arg12[%c0_30, %c0_31, %c0_32] : memref<1x8x128xf32, #tpu.memory_space<vmem>>, vector<1x8x128xf32>
    tpu.vector_store %arg12[%c0_30, %c0_31, %c0_32], %38 {strides = array<i32>} : memref<1x8x128xf32, #tpu.memory_space<vmem>>, vector<1x8x128xf32>,
    return
  }
  func.func @transform_0(%arg0: i32) -> (i32, i32, i32) {
    %c0_i32 = arith.constant 0 : i32
    %c0_i32_0 = arith.constant 0 : i32
    %c0_i32_1 = arith.constant 0 : i32
    return %arg0, %c0_i32, %c0_i32_0 : i32, i32, i32
  }
  func.func @transform_1(%arg0: i32) -> (i32, i32, i32) {
    %c0_i32 = arith.constant 0 : i32
    %c0_i32_0 = arith.constant 0 : i32
    %c0_i32_1 = arith.constant 0 : i32
    return %arg0, %c0_i32, %c0_i32_0 : i32, i32, i32
  }
  func.func @transform_2(%arg0: i32) -> (i32, i32, i32) {
    %c0_i32 = arith.constant 0 : i32
    %c0_i32_0 = arith.constant 0 : i32
    %c0_i32_1 = arith.constant 0 : i32
    return %arg0, %c0_i32, %c0_i32_0 : i32, i32, i32
  }
  func.func @transform_3(%arg0: i32) -> (i32, i32, i32) {
    %c0_i32 = arith.constant 0 : i32
    %c0_i32_0 = arith.constant 0 : i32
    %c0_i32_1 = arith.constant 0 : i32
    return %arg0, %c0_i32, %c0_i32_0 : i32, i32, i32
  }
  func.func @transform_4(%arg0: i32) -> (i32, i32) {
    %c0_i32 = arith.constant 0 : i32
    %c0_i32_0 = arith.constant 0 : i32
    %c0_i32_1 = arith.constant 0 : i32
    return %c0_i32, %c0_i32_0 : i32, i32
  }
  func.func @transform_5(%arg0: i32) -> (i32, i32) {
    %c0_i32 = arith.constant 0 : i32
    %c0_i32_0 = arith.constant 0 : i32
    %c0_i32_1 = arith.constant 0 : i32
    return %c0_i32, %c0_i32_0 : i32, i32
  }
  func.func @transform_6(%arg0: i32) -> (i32, i32) {
    %c0_i32 = arith.constant 0 : i32
    %c0_i32_0 = arith.constant 0 : i32
    %c0_i32_1 = arith.constant 0 : i32
    return %c0_i32, %c0_i32_0 : i32, i32
  }
  func.func @transform_7(%arg0: i32) -> (i32, i32) {
    %c0_i32 = arith.constant 0 : i32
    %c0_i32_0 = arith.constant 0 : i32
    %c0_i32_1 = arith.constant 0 : i32
    return %c0_i32, %c0_i32_0 : i32, i32
  }
  func.func @transform_8(%arg0: i32) -> (i32, i32) {
    %c0_i32 = arith.constant 0 : i32
    %c0_i32_0 = arith.constant 0 : i32
    %c0_i32_1 = arith.constant 0 : i32
    return %c0_i32, %c0_i32_0 : i32, i32
  }
  func.func @transform_9(%arg0: i32) -> (i32, i32) {
    %c0_i32 = arith.constant 0 : i32
    %c0_i32_0 = arith.constant 0 : i32
    %c0_i32_1 = arith.constant 0 : i32
    return %c0_i32, %c0_i32_0 : i32, i32
  }
  func.func @transform_10(%arg0: i32) -> (i32, i32) {
    %c0_i32 = arith.constant 0 : i32
    %c0_i32_0 = arith.constant 0 : i32
    %c0_i32_1 = arith.constant 0 : i32
    return %c0_i32, %c0_i32_0 : i32, i32
  }
  func.func @transform_11(%arg0: i32) -> (i32, i32, i32) {
    %c0_i32 = arith.constant 0 : i32
    %c0_i32_0 = arith.constant 0 : i32
    %c0_i32_1 = arith.constant 0 : i32
    return %arg0, %c0_i32, %c0_i32_0 : i32, i32, i32
  }
}

</mosaic_0001>

<llo_original>
// kernel: edge_mlp.1
$region0: #{edge_mlp.1}
  #allocation0 [shape = 'u32[]', space=smem, size = 0x4, offset = 0x4, fixed_abs, tag = 'smem constant byte address 0x4 - core index']
  #allocation1 [shape = 'u32[144,128]{1,0:T(1,128)}', space=vmem, size = 0x12000, scoped, tag = 'internal scratch']
  %s0 = inlined_call_operand.hbm [shape: f32[2,8,32], index: 0, kind: input, shape index: {}]
  %s1 = inlined_call_operand.hbm [shape: f32[2,1,256], index: 1, kind: input, shape index: {}]
  %s2 = inlined_call_operand.hbm [shape: f32[2,8,128], index: 2, kind: input, shape index: {}]
  %s3 = inlined_call_operand.hbm [shape: bf16[2,8,128], index: 3, kind: input, shape index: {}]
  %s4 = inlined_call_operand.hbm [shape: bf16[128,256], index: 4, kind: input, shape index: {}]
  %s5 = inlined_call_operand.hbm [shape: bf16[128,256], index: 5, kind: input, shape index: {}]
  %s6 = inlined_call_operand.hbm [shape: bf16[32,256], index: 6, kind: input, shape index: {}]
  %s7 = inlined_call_operand.hbm [shape: bf16[256,256], index: 7, kind: input, shape index: {}]
  %s8 = inlined_call_operand.hbm [shape: bf16[256,128], index: 8, kind: input, shape index: {}]
  %s9 = inlined_call_operand.hbm [shape: f32[1,256], index: 9, kind: input, shape index: {}]
  %s10 = inlined_call_operand.hbm [shape: f32[1,128], index: 10, kind: input, shape index: {}]
  %s11 = inlined_call_operand.hbm [shape: f32[2,8,128], index: 11, kind: output, shape index: {}]
  %s12 = sld [smem:[#allocation0]]
  $region121: #{edge_mlp.1} parent=0
    _
  %s14 = ssub.s32 1, %s12
  %s15 = scalar_select 0, %s14, %s12
  $region1: #{edge_mlp.1} parent=0
    #allocation2 [shape = 'u8[8192]{0}', space=vmem, size = 0x2000, scoped, tag = 'input window, operand 0']
    #allocation3 [shape = 's32[2]{0}', space=sflag, size = 0x8, scoped, tag = 'scoped memory for edge_mlp.1']
    #allocation4 [shape = 's32[2]{0}', space=sflag, size = 0x8, scoped, tag = 'scoped memory for edge_mlp.1']
    #allocation5 [shape = 'u8[2048]{0}', space=vmem, size = 0x800, scoped, tag = 'input window, operand 1']
    #allocation6 [shape = 's32[2]{0}', space=sflag, size = 0x8, scoped, tag = 'scoped memory for edge_mlp.1']
    #allocation7 [shape = 'u8[8192]{0}', space=vmem, size = 0x2000, scoped, tag = 'input window, operand 2']
    #allocation8 [shape = 'u8[4096]{0}', space=vmem, size = 0x1000, scoped, tag = 'input window, operand 3']
    #allocation9 [shape = 's32[2]{0}', space=sflag, size = 0x8, scoped, tag = 'scoped memory for edge_mlp.1']
    #allocation10 [shape = 'u8[65536]{0}', space=vmem, size = 0x10000, scoped, tag = 'input window, operand 4, single buffered']
    #allocation11 [shape = 'u8[65536]{0}', space=vmem, size = 0x10000, scoped, tag = 'input window, operand 5, single buffered']
    #allocation12 [shape = 's32[1]{0}', space=sflag, size = 0x4, scoped, tag = 'scoped memory for edge_mlp.1']
    #allocation13 [shape = 'u8[16384]{0}', space=vmem, size = 0x4000, scoped, tag = 'input window, operand 6, single buffered']
    #allocation14 [shape = 'u8[131072]{0}', space=vmem, size = 0x20000, scoped, tag = 'input window, operand 7, single buffered']
    #allocation15 [shape = 's32[1]{0}', space=sflag, size = 0x4, scoped, tag = 'scoped memory for edge_mlp.1']
    #allocation16 [shape = 'u8[65536]{0}', space=vmem, size = 0x10000, scoped, tag = 'input window, operand 8, single buffered']
    #allocation17 [shape = 'u8[1024]{0}', space=vmem, size = 0x400, scoped, tag = 'input window, operand 9, single buffered']
    #allocation18 [shape = 's32[1]{0}', space=sflag, size = 0x4, scoped, tag = 'scoped memory for edge_mlp.1']
    #allocation19 [shape = 'u8[512]{0}', space=vmem, size = 0x400, scoped, tag = 'input window, operand 10, single buffered']
    #allocation20 [shape = 'u8[8192]{0}', space=vmem, size = 0x2000, scoped, tag = 'output window, operand 0']
    %16 = vsyncpa [#allocation3], 0
    %s17 = scalar_lea.sflag [#allocation3], 1
    %18 = vsyncpa %s17, 0
    %19 = vsyncpa [#allocation6], 0
    %s20 = scalar_lea.sflag [#allocation6], 1
    %21 = vsyncpa %s20, 0
    %22 = vsyncpa [#allocation9], 0
    %s23 = scalar_lea.sflag [#allocation9], 1
    %24 = vsyncpa %s23, 0
    %25 = vsyncpa [#allocation12], 0
    %26 = vsyncpa [#allocation15], 0
    %27 = vsyncpa [#allocation18], 0
    %28 = vsyncpa [#allocation4], 0
    %s29 = scalar_lea.sflag [#allocation4], 1
    %30 = vsyncpa %s29, 0
    loop: start=0, step=1, limit=4
    $region2: #{edge_mlp.1} parent=1 // loop_pre_header
      _
    $region3: #{edge_mlp.1} parent=1 // loop_header
      %s32 = sphi 0, %s36
      %p33 = scmp.ge.s32.totalorder %s32, 4
      %s42 = sphi 0, %s44
      %s45 = sphi 0, %s42
      %s46 = sphi 0, %s45
      %s62 = sphi 0, %s46
      %s68 = sphi 0, %s70
      %s71 = sphi 0, %s68
      %s72 = sphi 0, %s71
      %s88 = sphi 0, %s72
      %s94 = sphi 0, %s96
      %s97 = sphi 0, %s94
      %s98 = sphi 0, %s97
      %s114 = sphi 0, %s98
      %s120 = sphi 0, %s122
      %s123 = sphi 0, %s120
      %s124 = sphi 0, %s123
      %s140 = sphi 0, %s124
      %s144 = sphi 0, %s144
      %s146 = sphi 0, %s144
      %s147 = sphi 0, %s146
      %s161 = sphi 0, %s147
      %s165 = sphi 0, %s165
      %s167 = sphi 0, %s165
      %s168 = sphi 0, %s167
      %s182 = sphi 0, %s168
      %s186 = sphi 0, %s186
      %s188 = sphi 0, %s186
      %s189 = sphi 0, %s188
      %s203 = sphi 0, %s189
      %s207 = sphi 0, %s207
      %s209 = sphi 0, %s207
      %s210 = sphi 0, %s209
      %s224 = sphi 0, %s210
      %s228 = sphi 0, %s228
      %s230 = sphi 0, %s228
      %s231 = sphi 0, %s230
      %s245 = sphi 0, %s231
      %s249 = sphi 0, %s249
      %s251 = sphi 0, %s249
      %s252 = sphi 0, %s251
      %s266 = sphi 0, %s252
      %s270 = sphi 0, %s270
      %s272 = sphi 0, %s270
      %s273 = sphi 0, %s272
      %s287 = sphi 0, %s273
      %s293 = sphi 0, %s295
      %s296 = sphi 0, %s293
      %s297 = sphi 0, %s296
      %s313 = sphi 0, %s297
    $region4: #{edge_mlp.1} parent=1 // loop_header_branch
      %35 = sbr.rel (%p33) target = $region8
    $region5: #{edge_mlp.1} parent=1 // loop_body
      %s37 = ssub.s32 %s32, 1
      %s38 = ssub.s32 %s32, 2
      %s39 = sadd.s32 %s32, 1
      %s40 = ssub.s32 %s32, %s39
      %p41 = scmp.eq.s32.totalorder %s40, 0
      %s43 = sadd.s32 %s42, 1
      %s44 = scalar_select %p41, %s42, %s43
      %p47 = pneg %p41
      %p48 = scmp.eq.s32.totalorder %s32, 1
      %p49 = por %p47, %p48
      %p50 = scmp.ne.s32.totalorder %s42, %s45
      %p51 = scmp.eq.s32.totalorder %s32, 0
      %p52 = por %p50, %p51
      %p53 = scmp.ne.s32.totalorder %s42, %s45
      %p54 = scmp.eq.s32.totalorder %s37, 1
      %p55 = por %p53, %p54
      %p56 = scmp.ne.s32.totalorder %s45, %s46
      %p57 = scmp.eq.s32.totalorder %s37, 0
      %p58 = por %p56, %p57
      %p59 = scmp.ne.s32.totalorder %s45, %s46
      %p60 = scmp.eq.s32.totalorder %s38, 1
      %p61 = por %p59, %p60
      %p63 = scmp.ne.s32.totalorder %s46, %s62
      %p64 = scmp.eq.s32.totalorder %s38, 0
      %p65 = por %p63, %p64
      %s66 = ssub.s32 %s32, %s39
      %p67 = scmp.eq.s32.totalorder %s66, 0
      %s69 = sadd.s32 %s68, 1
      %s70 = scalar_select %p67, %s68, %s69
      %p73 = pneg %p67
      %p74 = scmp.eq.s32.totalorder %s32, 1
      %p75 = por %p73, %p74
      %p76 = scmp.ne.s32.totalorder %s68, %s71
      %p77 = scmp.eq.s32.totalorder %s32, 0
      %p78 = por %p76, %p77
      %p79 = scmp.ne.s32.totalorder %s68, %s71
      %p80 = scmp.eq.s32.totalorder %s37, 1
      %p81 = por %p79, %p80
      %p82 = scmp.ne.s32.totalorder %s71, %s72
      %p83 = scmp.eq.s32.totalorder %s37, 0
      %p84 = por %p82, %p83
      %p85 = scmp.ne.s32.totalorder %s71, %s72
      %p86 = scmp.eq.s32.totalorder %s38, 1
      %p87 = por %p85, %p86
      %p89 = scmp.ne.s32.totalorder %s72, %s88
      %p90 = scmp.eq.s32.totalorder %s38, 0
      %p91 = por %p89, %p90
      %s92 = ssub.s32 %s32, %s39
      %p93 = scmp.eq.s32.totalorder %s92, 0
      %s95 = sadd.s32 %s94, 1
      %s96 = scalar_select %p93, %s94, %s95
      %p99 = pneg %p93
      %p100 = scmp.eq.s32.totalorder %s32, 1
      %p101 = por %p99, %p100
      %p102 = scmp.ne.s32.totalorder %s94, %s97
      %p103 = scmp.eq.s32.totalorder %s32, 0
      %p104 = por %p102, %p103
      %p105 = scmp.ne.s32.totalorder %s94, %s97
      %p106 = scmp.eq.s32.totalorder %s37, 1
      %p107 = por %p105, %p106
      %p108 = scmp.ne.s32.totalorder %s97, %s98
      %p109 = scmp.eq.s32.totalorder %s37, 0
      %p110 = por %p108, %p109
      %p111 = scmp.ne.s32.totalorder %s97, %s98
      %p112 = scmp.eq.s32.totalorder %s38, 1
      %p113 = por %p111, %p112
      %p115 = scmp.ne.s32.totalorder %s98, %s114
      %p116 = scmp.eq.s32.totalorder %s38, 0
      %p117 = por %p115, %p116
      %s118 = ssub.s32 %s32, %s39
      %p119 = scmp.eq.s32.totalorder %s118, 0
      %s121 = sadd.s32 %s120, 1
      %s122 = scalar_select %p119, %s120, %s121
      %p125 = pneg %p119
      %p126 = scmp.eq.s32.totalorder %s32, 1
      %p127 = por %p125, %p126
      %p128 = scmp.ne.s32.totalorder %s120, %s123
      %p129 = scmp.eq.s32.totalorder %s32, 0
      %p130 = por %p128, %p129
      %p131 = scmp.ne.s32.totalorder %s120, %s123
      %p132 = scmp.eq.s32.totalorder %s37, 1
      %p133 = por %p131, %p132
      %p134 = scmp.ne.s32.totalorder %s123, %s124
      %p135 = scmp.eq.s32.totalorder %s37, 0
      %p136 = por %p134, %p135
      %p137 = scmp.ne.s32.totalorder %s123, %s124
      %p138 = scmp.eq.s32.totalorder %s38, 1
      %p139 = por %p137, %p138
      %p141 = scmp.ne.s32.totalorder %s124, %s140
      %p142 = scmp.eq.s32.totalorder %s38, 0
      %p143 = por %p141, %p142
      %s145 = sadd.s32 %s144, 1
      %p148 = scmp.eq.s32.totalorder %s32, 1
      %p149 = scmp.ne.s32.totalorder %s144, %s146
      %p150 = scmp.eq.s32.totalorder %s32, 0
      %p151 = por %p149, %p150
      %p152 = scmp.ne.s32.totalorder %s144, %s146
      %p153 = scmp.eq.s32.totalorder %s37, 1
      %p154 = por %p152, %p153
      %p155 = scmp.ne.s32.totalorder %s146, %s147
      %p156 = scmp.eq.s32.totalorder %s37, 0
      %p157 = por %p155, %p156
      %p158 = scmp.ne.s32.totalorder %s146, %s147
      %p159 = scmp.eq.s32.totalorder %s38, 1
      %p160 = por %p158, %p159
      %p162 = scmp.ne.s32.totalorder %s147, %s161
      %p163 = scmp.eq.s32.totalorder %s38, 0
      %p164 = por %p162, %p163
      %s166 = sadd.s32 %s165, 1
      %p169 = scmp.eq.s32.totalorder %s32, 1
      %p170 = scmp.ne.s32.totalorder %s165, %s167
      %p171 = scmp.eq.s32.totalorder %s32, 0
      %p172 = por %p170, %p171
      %p173 = scmp.ne.s32.totalorder %s165, %s167
      %p174 = scmp.eq.s32.totalorder %s37, 1
      %p175 = por %p173, %p174
      %p176 = scmp.ne.s32.totalorder %s167, %s168
      %p177 = scmp.eq.s32.totalorder %s37, 0
      %p178 = por %p176, %p177
      %p179 = scmp.ne.s32.totalorder %s167, %s168
      %p180 = scmp.eq.s32.totalorder %s38, 1
      %p181 = por %p179, %p180
      %p183 = scmp.ne.s32.totalorder %s168, %s182
      %p184 = scmp.eq.s32.totalorder %s38, 0
      %p185 = por %p183, %p184
      %s187 = sadd.s32 %s186, 1
      %p190 = scmp.eq.s32.totalorder %s32, 1
      %p191 = scmp.ne.s32.totalorder %s186, %s188
      %p192 = scmp.eq.s32.totalorder %s32, 0
      %p193 = por %p191, %p192
      %p194 = scmp.ne.s32.totalorder %s186, %s188
      %p195 = scmp.eq.s32.totalorder %s37, 1
      %p196 = por %p194, %p195
      %p197 = scmp.ne.s32.totalorder %s188, %s189
      %p198 = scmp.eq.s32.totalorder %s37, 0
      %p199 = por %p197, %p198
      %p200 = scmp.ne.s32.totalorder %s188, %s189
      %p201 = scmp.eq.s32.totalorder %s38, 1
      %p202 = por %p200, %p201
      %p204 = scmp.ne.s32.totalorder %s189, %s203
      %p205 = scmp.eq.s32.totalorder %s38, 0
      %p206 = por %p204, %p205
      %s208 = sadd.s32 %s207, 1
      %p211 = scmp.eq.s32.totalorder %s32, 1
      %p212 = scmp.ne.s32.totalorder %s207, %s209
      %p213 = scmp.eq.s32.totalorder %s32, 0
      %p214 = por %p212, %p213
      %p215 = scmp.ne.s32.totalorder %s207, %s209
      %p216 = scmp.eq.s32.totalorder %s37, 1
      %p217 = por %p215, %p216
      %p218 = scmp.ne.s32.totalorder %s209, %s210
      %p219 = scmp.eq.s32.totalorder %s37, 0
      %p220 = por %p218, %p219
      %p221 = scmp.ne.s32.totalorder %s209, %s210
      %p222 = scmp.eq.s32.totalorder %s38, 1
      %p223 = por %p221, %p222
      %p225 = scmp.ne.s32.totalorder %s210, %s224
      %p226 = scmp.eq.s32.totalorder %s38, 0
      %p227 = por %p225, %p226
      %s229 = sadd.s32 %s228, 1
      %p232 = scmp.eq.s32.totalorder %s32, 1
      %p233 = scmp.ne.s32.totalorder %s228, %s230
      %p234 = scmp.eq.s32.totalorder %s32, 0
      %p235 = por %p233, %p234
      %p236 = scmp.ne.s32.totalorder %s228, %s230
      %p237 = scmp.eq.s32.totalorder %s37, 1
      %p238 = por %p236, %p237
      %p239 = scmp.ne.s32.totalorder %s230, %s231
      %p240 = scmp.eq.s32.totalorder %s37, 0
      %p241 = por %p239, %p240
      %p242 = scmp.ne.s32.totalorder %s230, %s231
      %p243 = scmp.eq.s32.totalorder %s38, 1
      %p244 = por %p242, %p243
      %p246 = scmp.ne.s32.totalorder %s231, %s245
      %p247 = scmp.eq.s32.totalorder %s38, 0
      %p248 = por %p246, %p247
      %s250 = sadd.s32 %s249, 1
      %p253 = scmp.eq.s32.totalorder %s32, 1
      %p254 = scmp.ne.s32.totalorder %s249, %s251
      %p255 = scmp.eq.s32.totalorder %s32, 0
      %p256 = por %p254, %p255
      %p257 = scmp.ne.s32.totalorder %s249, %s251
      %p258 = scmp.eq.s32.totalorder %s37, 1
      %p259 = por %p257, %p258
      %p260 = scmp.ne.s32.totalorder %s251, %s252
      %p261 = scmp.eq.s32.totalorder %s37, 0
      %p262 = por %p260, %p261
      %p263 = scmp.ne.s32.totalorder %s251, %s252
      %p264 = scmp.eq.s32.totalorder %s38, 1
      %p265 = por %p263, %p264
      %p267 = scmp.ne.s32.totalorder %s252, %s266
      %p268 = scmp.eq.s32.totalorder %s38, 0
      %p269 = por %p267, %p268
      %s271 = sadd.s32 %s270, 1
      %p274 = scmp.eq.s32.totalorder %s32, 1
      %p275 = scmp.ne.s32.totalorder %s270, %s272
      %p276 = scmp.eq.s32.totalorder %s32, 0
      %p277 = por %p275, %p276
      %p278 = scmp.ne.s32.totalorder %s270, %s272
      %p279 = scmp.eq.s32.totalorder %s37, 1
      %p280 = por %p278, %p279
      %p281 = scmp.ne.s32.totalorder %s272, %s273
      %p282 = scmp.eq.s32.totalorder %s37, 0
      %p283 = por %p281, %p282
      %p284 = scmp.ne.s32.totalorder %s272, %s273
      %p285 = scmp.eq.s32.totalorder %s38, 1
      %p286 = por %p284, %p285
      %p288 = scmp.ne.s32.totalorder %s273, %s287
      %p289 = scmp.eq.s32.totalorder %s38, 0
      %p290 = por %p288, %p289
      %s291 = ssub.s32 %s32, %s39
      %p292 = scmp.eq.s32.totalorder %s291, 0
      %s294 = sadd.s32 %s293, 1
      %s295 = scalar_select %p292, %s293, %s294
      %p298 = pneg %p292
      %p299 = scmp.eq.s32.totalorder %s32, 1
      %p300 = por %p298, %p299
      %p301 = scmp.ne.s32.totalorder %s293, %s296
      %p302 = scmp.eq.s32.totalorder %s32, 0
      %p303 = por %p301, %p302
      %p304 = scmp.ne.s32.totalorder %s293, %s296
      %p305 = scmp.eq.s32.totalorder %s37, 1
      %p306 = por %p304, %p305
      %p307 = scmp.ne.s32.totalorder %s296, %s297
      %p308 = scmp.eq.s32.totalorder %s37, 0
      %p309 = por %p307, %p308
      %p310 = scmp.ne.s32.totalorder %s296, %s297
      %p311 = scmp.eq.s32.totalorder %s38, 1
      %p312 = por %p310, %p311
      %p314 = scmp.ne.s32.totalorder %s297, %s313
      %p315 = scmp.eq.s32.totalorder %s38, 0
      %p316 = por %p314, %p315
      %p317 = scmp.le.s32.totalorder 1, %s32
      %p318 = scmp.lt.s32.totalorder %s32, 3
      %p319 = pnand %p317, %p318
      %p320 = pneg %p319
      // Predicated region
      $region9: #{edge_mlp.1} parent=5 // pred_check
        _
      $region10: #{edge_mlp.1} parent=5 // pred_check_branch
        %322 = sbr.rel (%p319) target = $region12
      $region11: #{edge_mlp.1} parent=5 // pred_region
        %s323 = ssub.s32 %s32, 1
        // Predicated region
        $region13: #{edge_mlp.1} parent=11 // pred_check
          %p324 = pneg %p157
        $region14: #{edge_mlp.1} parent=11 // pred_check_branch
          %326 = sbr.rel (%p324) target = $region16
        $region15: #{edge_mlp.1} parent=11 // pred_region
          %s328 = ssub.s32 2048, 2048
          %329 = vsyncadd [#allocation9], %s328
          %s330 = sshll.u32 [#allocation10], 4
          %s331 = int_to_ptr.vmem [resolvable:$true] %s330
          %336 = dma.hbm_to_vmem [thread:$0]  %s4, 2048, %s331, [#allocation9], 128, 128, 8
        $region16: #{edge_mlp.1} parent=11 // pred_fallthru
          _
        // Predicated region
        $region17: #{edge_mlp.1} parent=11 // pred_check
          %p337 = pneg %p178
        $region18: #{edge_mlp.1} parent=11 // pred_check_branch
          %339 = sbr.rel (%p337) target = $region20
        $region19: #{edge_mlp.1} parent=11 // pred_region
          %s341 = ssub.s32 2048, 2048
          %342 = vsyncadd [#allocation12], %s341
          %s343 = sshll.u32 [#allocation11], 4
          %s344 = int_to_ptr.vmem [resolvable:$true] %s343
          %349 = dma.hbm_to_vmem [thread:$0]  %s5, 2048, %s344, [#allocation12], 128, 128, 8
        $region20: #{edge_mlp.1} parent=11 // pred_fallthru
          _
        // Predicated region
        $region21: #{edge_mlp.1} parent=11 // pred_check
          %p350 = pneg %p199
        $region22: #{edge_mlp.1} parent=11 // pred_check_branch
          %352 = sbr.rel (%p350) target = $region24
        $region23: #{edge_mlp.1} parent=11 // pred_region
          %s354 = ssub.s32 512, 512
          %355 = vsyncadd [#allocation12], %s354
          %s356 = sshll.u32 [#allocation13], 4
          %s357 = int_to_ptr.vmem [resolvable:$true] %s356
          %362 = dma.hbm_to_vmem [thread:$0]  %s6, 512, %s357, [#allocation12], 128, 128, 8
        $region24: #{edge_mlp.1} parent=11 // pred_fallthru
          _
        // Predicated region
        $region25: #{edge_mlp.1} parent=11 // pred_check
          %p363 = pneg %p220
        $region26: #{edge_mlp.1} parent=11 // pred_check_branch
          %365 = sbr.rel (%p363) target = $region28
        $region27: #{edge_mlp.1} parent=11 // pred_region
          %s367 = ssub.s32 4096, 4096
          %368 = vsyncadd [#allocation15], %s367
          %s369 = sshll.u32 [#allocation14], 4
          %s370 = int_to_ptr.vmem [resolvable:$true] %s369
          %375 = dma.hbm_to_vmem [thread:$0]  %s7, 4096, %s370, [#allocation15], 128, 128, 8
        $region28: #{edge_mlp.1} parent=11 // pred_fallthru
          _
        // Predicated region
        $region29: #{edge_mlp.1} parent=11 // pred_check
          %p376 = pneg %p241
        $region30: #{edge_mlp.1} parent=11 // pred_check_branch
          %378 = sbr.rel (%p376) target = $region32
        $region31: #{edge_mlp.1} parent=11 // pred_region
          %s380 = ssub.s32 2048, 2048
          %381 = vsyncadd [#allocation15], %s380
          %s382 = sshll.u32 [#allocation16], 4
          %s383 = int_to_ptr.vmem [resolvable:$true] %s382
          %388 = dma.hbm_to_vmem [thread:$0]  %s8, 2048, %s383, [#allocation15], 64, 64, 4
        $region32: #{edge_mlp.1} parent=11 // pred_fallthru
          _
        // Predicated region
        $region33: #{edge_mlp.1} parent=11 // pred_check
          %p389 = pneg %p262
        $region34: #{edge_mlp.1} parent=11 // pred_check_branch
          %391 = sbr.rel (%p389) target = $region36
        $region35: #{edge_mlp.1} parent=11 // pred_region
          %s393 = ssub.s32 32, 32
          %394 = vsyncadd [#allocation18], %s393
          %s396 = sshll.u32 [#allocation17], 4
          %s397 = int_to_ptr.vmem [resolvable:$true] %s396
          %399 = dma.hbm_to_vmem [thread:$0]  %s9, 32, %s397, [#allocation18]
        $region36: #{edge_mlp.1} parent=11 // pred_fallthru
          _
        // Predicated region
        $region37: #{edge_mlp.1} parent=11 // pred_check
          %p400 = pneg %p283
        $region38: #{edge_mlp.1} parent=11 // pred_check_branch
          %402 = sbr.rel (%p400) target = $region40
        $region39: #{edge_mlp.1} parent=11 // pred_region
          %s404 = ssub.s32 16, 16
          %405 = vsyncadd [#allocation18], %s404
          %s407 = sshll.u32 [#allocation19], 4
          %s408 = int_to_ptr.vmem [resolvable:$true] %s407
          %410 = dma.hbm_to_vmem [thread:$0]  %s10, 16, %s408, [#allocation18]
        $region40: #{edge_mlp.1} parent=11 // pred_fallthru
          _
      $region12: #{edge_mlp.1} parent=5 // pred_fallthru
        _
      %p411 = scmp.lt.s32.totalorder %s32, 2
      // Predicated region
      $region41: #{edge_mlp.1} parent=5 // pred_check
        %p412 = pneg %p411
      $region42: #{edge_mlp.1} parent=5 // pred_check_branch
        %414 = sbr.rel (%p412) target = $region44
      $region43: #{edge_mlp.1} parent=5 // pred_region
        // Predicated region
        $region45: #{edge_mlp.1} parent=43 // pred_check
          %p415 = pneg %p52
        $region46: #{edge_mlp.1} parent=43 // pred_check_branch
          %417 = sbr.rel (%p415) target = $region48
        $region47: #{edge_mlp.1} parent=43 // pred_region
          %s418 = sand.u32 %s42, 1
          %s419 = scalar_lea.sflag [#allocation3], %s418
          %s420 = sand.u32 %s42, 1
          %s421 = smul.addr %s420, 8
          %s422 = scalar_lea.vmem [#allocation2], %s421
          %s424 = ssub.s32 128, 128
          %425 = vsyncadd %s419, %s424
          %s426 = smul.addr %s32, 128
          %s427 = scalar_lea.hbm %s0, %s426
          %s429 = sshll.u32 %s422, 4
          %s430 = int_to_ptr.vmem [resolvable:$true] %s429
          %432 = dma.hbm_to_vmem [thread:$0]  %s427, 128, %s430, %s419
        $region48: #{edge_mlp.1} parent=43 // pred_fallthru
          _
        // Predicated region
        $region49: #{edge_mlp.1} parent=43 // pred_check
          %p433 = pneg %p78
        $region50: #{edge_mlp.1} parent=43 // pred_check_branch
          %435 = sbr.rel (%p433) target = $region52
        $region51: #{edge_mlp.1} parent=43 // pred_region
          %s436 = sand.u32 %s32, 1
          %s437 = scalar_lea.sflag [#allocation6], %s436
          %s438 = sand.u32 %s68, 1
          %s439 = smul.addr %s438, 2
          %s440 = scalar_lea.vmem [#allocation5], %s439
          %s442 = ssub.s32 32, 32
          %443 = vsyncadd %s437, %s442
          %s444 = smul.addr %s32, 2
          %s445 = smul.addr %s444, 16
          %s446 = scalar_lea.hbm %s1, %s445
          %s448 = sshll.u32 %s440, 4
          %s449 = int_to_ptr.vmem [resolvable:$true] %s448
          %451 = dma.hbm_to_vmem [thread:$0]  %s446, 32, %s449, %s437
        $region52: #{edge_mlp.1} parent=43 // pred_fallthru
          _
        // Predicated region
        $region53: #{edge_mlp.1} parent=43 // pred_check
          %p452 = pneg %p104
        $region54: #{edge_mlp.1} parent=43 // pred_check_branch
          %454 = sbr.rel (%p452) target = $region56
        $region55: #{edge_mlp.1} parent=43 // pred_region
          %s455 = sand.u32 %s32, 1
          %s456 = scalar_lea.sflag [#allocation6], %s455
          %s457 = sand.u32 %s94, 1
          %s458 = smul.addr %s457, 8
          %s459 = scalar_lea.vmem [#allocation7], %s458
          %s461 = ssub.s32 128, 128
          %462 = vsyncadd %s456, %s461
          %s463 = smul.addr %s32, 128
          %s464 = scalar_lea.hbm %s2, %s463
          %s466 = sshll.u32 %s459, 4
          %s467 = int_to_ptr.vmem [resolvable:$true] %s466
          %469 = dma.hbm_to_vmem [thread:$0]  %s464, 128, %s467, %s456
        $region56: #{edge_mlp.1} parent=43 // pred_fallthru
          _
        // Predicated region
        $region57: #{edge_mlp.1} parent=43 // pred_check
          %p470 = pneg %p130
        $region58: #{edge_mlp.1} parent=43 // pred_check_branch
          %472 = sbr.rel (%p470) target = $region60
        $region59: #{edge_mlp.1} parent=43 // pred_region
          %s473 = sand.u32 %s32, 1
          %s474 = scalar_lea.sflag [#allocation9], %s473
          %s475 = sand.u32 %s120, 1
          %s476 = smul.addr %s475, 4
          %s477 = scalar_lea.vmem [#allocation8], %s476
          %s479 = ssub.s32 64, 64
          %480 = vsyncadd %s474, %s479
          %s481 = smul.addr %s32, 64
          %s482 = scalar_lea.hbm %s3, %s481
          %s484 = sshll.u32 %s477, 4
          %s485 = int_to_ptr.vmem [resolvable:$true] %s484
          %487 = dma.hbm_to_vmem [thread:$0]  %s482, 64, %s485, %s474
        $region60: #{edge_mlp.1} parent=43 // pred_fallthru
          _
      $region44: #{edge_mlp.1} parent=5 // pred_fallthru
        _
      %p488 = scmp.le.s32.totalorder 1, %s32
      %p489 = scmp.lt.s32.totalorder %s32, 3
      %p490 = pnand %p488, %p489
      %p491 = pneg %p490
      // Predicated region
      $region61: #{edge_mlp.1} parent=5 // pred_check
        _
      $region62: #{edge_mlp.1} parent=5 // pred_check_branch
        %493 = sbr.rel (%p490) target = $region64
      $region63: #{edge_mlp.1} parent=5 // pred_region
        %s494 = ssub.s32 %s32, 1
        %s495 = sand.u32 %s45, 1
        %s496 = scalar_lea.sflag [#allocation3], %s495
        %s497 = sand.u32 %s45, 1
        %s498 = smul.addr %s497, 8
        %s499 = scalar_lea.vmem [#allocation2], %s498
        // Predicated region
        $region65: #{edge_mlp.1} parent=63 // pred_check
          %p500 = pneg %p58
        $region66: #{edge_mlp.1} parent=63 // pred_check_branch
          %502 = sbr.rel (%p500) target = $region68
        $region67: #{edge_mlp.1} parent=63 // pred_region
          %503 = dma.done %s496, 128
        $region68: #{edge_mlp.1} parent=63 // pred_fallthru
          _
        %s504 = sand.u32 %s37, 1
        %s505 = scalar_lea.sflag [#allocation6], %s504
        %s506 = sand.u32 %s71, 1
        %s507 = smul.addr %s506, 2
        %s508 = scalar_lea.vmem [#allocation5], %s507
        // Predicated region
        $region69: #{edge_mlp.1} parent=63 // pred_check
          %p509 = pneg %p84
        $region70: #{edge_mlp.1} parent=63 // pred_check_branch
          %511 = sbr.rel (%p509) target = $region72
        $region71: #{edge_mlp.1} parent=63 // pred_region
          %512 = dma.done %s505, 32
        $region72: #{edge_mlp.1} parent=63 // pred_fallthru
          _
        %s513 = sand.u32 %s37, 1
        %s514 = scalar_lea.sflag [#allocation6], %s513
        %s515 = sand.u32 %s97, 1
        %s516 = smul.addr %s515, 8
        %s517 = scalar_lea.vmem [#allocation7], %s516
        // Predicated region
        $region73: #{edge_mlp.1} parent=63 // pred_check
          %p518 = pneg %p110
        $region74: #{edge_mlp.1} parent=63 // pred_check_branch
          %520 = sbr.rel (%p518) target = $region76
        $region75: #{edge_mlp.1} parent=63 // pred_region
          %521 = dma.done %s514, 128
        $region76: #{edge_mlp.1} parent=63 // pred_fallthru
          _
        %s522 = sand.u32 %s37, 1
        %s523 = scalar_lea.sflag [#allocation9], %s522
        %s524 = sand.u32 %s123, 1
        %s525 = smul.addr %s524, 4
        %s526 = scalar_lea.vmem [#allocation8], %s525
        // Predicated region
        $region77: #{edge_mlp.1} parent=63 // pred_check
          %p527 = pneg %p136
        $region78: #{edge_mlp.1} parent=63 // pred_check_branch
          %529 = sbr.rel (%p527) target = $region80
        $region79: #{edge_mlp.1} parent=63 // pred_region
          %530 = dma.done %s523, 64
        $region80: #{edge_mlp.1} parent=63 // pred_fallthru
          _
        // Predicated region
        $region81: #{edge_mlp.1} parent=63 // pred_check
          %p531 = pneg %p157
        $region82: #{edge_mlp.1} parent=63 // pred_check_branch
          %533 = sbr.rel (%p531) target = $region84
        $region83: #{edge_mlp.1} parent=63 // pred_region
          %534 = dma.done [#allocation9], 2048
        $region84: #{edge_mlp.1} parent=63 // pred_fallthru
          _
        // Predicated region
        $region85: #{edge_mlp.1} parent=63 // pred_check
          %p535 = pneg %p178
        $region86: #{edge_mlp.1} parent=63 // pred_check_branch
          %537 = sbr.rel (%p535) target = $region88
        $region87: #{edge_mlp.1} parent=63 // pred_region
          %538 = dma.done [#allocation12], 2048
        $region88: #{edge_mlp.1} parent=63 // pred_fallthru
          _
        // Predicated region
        $region89: #{edge_mlp.1} parent=63 // pred_check
          %p539 = pneg %p199
        $region90: #{edge_mlp.1} parent=63 // pred_check_branch
          %541 = sbr.rel (%p539) target = $region92
        $region91: #{edge_mlp.1} parent=63 // pred_region
          %542 = dma.done [#allocation12], 512
        $region92: #{edge_mlp.1} parent=63 // pred_fallthru
          _
        // Predicated region
        $region93: #{edge_mlp.1} parent=63 // pred_check
          %p543 = pneg %p220
        $region94: #{edge_mlp.1} parent=63 // pred_check_branch
          %545 = sbr.rel (%p543) target = $region96
        $region95: #{edge_mlp.1} parent=63 // pred_region
          %546 = dma.done [#allocation15], 4096
        $region96: #{edge_mlp.1} parent=63 // pred_fallthru
          _
        // Predicated region
        $region97: #{edge_mlp.1} parent=63 // pred_check
          %p547 = pneg %p241
        $region98: #{edge_mlp.1} parent=63 // pred_check_branch
          %549 = sbr.rel (%p547) target = $region100
        $region99: #{edge_mlp.1} parent=63 // pred_region
          %550 = dma.done [#allocation15], 2048
        $region100: #{edge_mlp.1} parent=63 // pred_fallthru
          _
        // Predicated region
        $region101: #{edge_mlp.1} parent=63 // pred_check
          %p551 = pneg %p262
        $region102: #{edge_mlp.1} parent=63 // pred_check_branch
          %553 = sbr.rel (%p551) target = $region104
        $region103: #{edge_mlp.1} parent=63 // pred_region
          %554 = dma.done [#allocation18], 32
        $region104: #{edge_mlp.1} parent=63 // pred_fallthru
          _
        // Predicated region
        $region105: #{edge_mlp.1} parent=63 // pred_check
          %p555 = pneg %p283
        $region106: #{edge_mlp.1} parent=63 // pred_check_branch
          %557 = sbr.rel (%p555) target = $region108
        $region107: #{edge_mlp.1} parent=63 // pred_region
          %558 = dma.done [#allocation18], 16
        $region108: #{edge_mlp.1} parent=63 // pred_fallthru
          _
        %s559 = sand.u32 %s45, 1
        %s560 = scalar_lea.sflag [#allocation3], %s559
        %s561 = sand.u32 %s45, 1
        %s562 = smul.addr %s561, 8
        %s563 = scalar_lea.vmem [#allocation2], %s562
        %p564 = pneg %p58
        %p565 = pneg %p55
        %s566 = sand.u32 %s37, 1
        %s567 = scalar_lea.sflag [#allocation6], %s566
        %s568 = sand.u32 %s71, 1
        %s569 = smul.addr %s568, 2
        %s570 = scalar_lea.vmem [#allocation5], %s569
        %p571 = pneg %p84
        %p572 = pneg %p81
        %s573 = sand.u32 %s37, 1
        %s574 = scalar_lea.sflag [#allocation6], %s573
        %s575 = sand.u32 %s97, 1
        %s576 = smul.addr %s575, 8
        %s577 = scalar_lea.vmem [#allocation7], %s576
        %p578 = pneg %p110
        %p579 = pneg %p107
        %s580 = sand.u32 %s37, 1
        %s581 = scalar_lea.sflag [#allocation9], %s580
        %s582 = sand.u32 %s123, 1
        %s583 = smul.addr %s582, 4
        %s584 = scalar_lea.vmem [#allocation8], %s583
        %p585 = pneg %p136
        %p586 = pneg %p133
        %p587 = pneg %p157
        %p588 = pneg %p154
        %p589 = pneg %p178
        %p590 = pneg %p175
        %p591 = pneg %p199
        %p592 = pneg %p196
        %p593 = pneg %p220
        %p594 = pneg %p217
        %p595 = pneg %p241
        %p596 = pneg %p238
        %p597 = pneg %p262
        %p598 = pneg %p259
        %p599 = pneg %p283
        %p600 = pneg %p280
        %p601 = pneg %p309
        %p602 = pneg %p306
        %s603 = sand.u32 %s296, 1
        %s604 = scalar_lea.sflag [#allocation4], %s603
        %s605 = sand.u32 %s296, 1
        %s606 = smul.addr %s605, 8
        %s607 = scalar_lea.vmem [#allocation20], %s606
        %v609 = vld [vmem:[%s517] sm:$0xff]
        %v610 = vpack.c.bf16 %v609, %v609
        %v611 = vld [vmem:[%s526] sm:$0xf]
        %v612 = vld [vmem:[#allocation10] sm:$0xff]
        %v613 = vld [vmem:[#allocation10 + $0x8] sm:$0xff]
        %v614 = vld [vmem:[#allocation10 + $0x10] sm:$0xff]
        %v615 = vld [vmem:[#allocation10 + $0x18] sm:$0xff]
        %v616 = vld [vmem:[#allocation10 + $0x20] sm:$0xff]
        %v617 = vld [vmem:[#allocation10 + $0x28] sm:$0xff]
        %v618 = vld [vmem:[#allocation10 + $0x30] sm:$0xff]
        %v619 = vld [vmem:[#allocation10 + $0x38] sm:$0xff]
        %v620 = vld [vmem:[#allocation10 + $0x40] sm:$0xff]
        %v621 = vld [vmem:[#allocation10 + $0x48] sm:$0xff]
        %v622 = vld [vmem:[#allocation10 + $0x50] sm:$0xff]
        %v623 = vld [vmem:[#allocation10 + $0x58] sm:$0xff]
        %v624 = vld [vmem:[#allocation10 + $0x60] sm:$0xff]
        %v625 = vld [vmem:[#allocation10 + $0x68] sm:$0xff]
        %v626 = vld [vmem:[#allocation10 + $0x70] sm:$0xff]
        %v627 = vld [vmem:[#allocation10 + $0x78] sm:$0xff]
        %v628 = vld [vmem:[#allocation11] sm:$0xff]
        %v629 = vld [vmem:[#allocation11 + $0x8] sm:$0xff]
        %v630 = vld [vmem:[#allocation11 + $0x10] sm:$0xff]
        %v631 = vld [vmem:[#allocation11 + $0x18] sm:$0xff]
        %v632 = vld [vmem:[#allocation11 + $0x20] sm:$0xff]
        %v633 = vld [vmem:[#allocation11 + $0x28] sm:$0xff]
        %v634 = vld [vmem:[#allocation11 + $0x30] sm:$0xff]
        %v635 = vld [vmem:[#allocation11 + $0x38] sm:$0xff]
        %v636 = vld [vmem:[#allocation11 + $0x40] sm:$0xff]
        %v637 = vld [vmem:[#allocation11 + $0x48] sm:$0xff]
        %v638 = vld [vmem:[#allocation11 + $0x50] sm:$0xff]
        %v639 = vld [vmem:[#allocation11 + $0x58] sm:$0xff]
        %v640 = vld [vmem:[#allocation11 + $0x60] sm:$0xff]
        %v641 = vld [vmem:[#allocation11 + $0x68] sm:$0xff]
        %v642 = vld [vmem:[#allocation11 + $0x70] sm:$0xff]
        %v643 = vld [vmem:[#allocation11 + $0x78] sm:$0xff]
        %v660 = vunpack.c.l.b16 %v628
        %v661 = vunpack.c.h.b16 %v628
        %v662 = vunpack.c.l.b16 %v629
        %v663 = vunpack.c.h.b16 %v629
        %v664 = vunpack.c.l.b16 %v630
        %v665 = vunpack.c.h.b16 %v630
        %v666 = vunpack.c.l.b16 %v631
        %v667 = vunpack.c.h.b16 %v631
        %v668 = vunpack.c.l.b16 %v632
        %v669 = vunpack.c.h.b16 %v632
        %v670 = vunpack.c.l.b16 %v633
        %v671 = vunpack.c.h.b16 %v633
        %v672 = vunpack.c.l.b16 %v634
        %v673 = vunpack.c.h.b16 %v634
        %v674 = vunpack.c.l.b16 %v635
        %v675 = vunpack.c.h.b16 %v635
        %v676 = vunpack.c.l.b16 %v636
        %v677 = vunpack.c.h.b16 %v636
        %v678 = vunpack.c.l.b16 %v637
        %v679 = vunpack.c.h.b16 %v637
        %v680 = vunpack.c.l.b16 %v638
        %v681 = vunpack.c.h.b16 %v638
        %v682 = vunpack.c.l.b16 %v639
        %v683 = vunpack.c.h.b16 %v639
        %v684 = vunpack.c.l.b16 %v640
        %v685 = vunpack.c.h.b16 %v640
        %v686 = vunpack.c.l.b16 %v641
        %v687 = vunpack.c.h.b16 %v641
        %v688 = vunpack.c.l.b16 %v642
        %v689 = vunpack.c.h.b16 %v642
        %v690 = vunpack.c.l.b16 %v643
        %v691 = vunpack.c.h.b16 %v643
        %v692 = vpack.c.b16 %v662, %v660
        %v693 = vpack.c.b16 %v663, %v661
        %v694 = vpack.c.b16 %v666, %v664
        %v695 = vpack.c.b16 %v667, %v665
        %v696 = vpack.c.b16 %v670, %v668
        %v697 = vpack.c.b16 %v671, %v669
        %v698 = vpack.c.b16 %v674, %v672
        %v699 = vpack.c.b16 %v675, %v673
        %v700 = vpack.c.b16 %v678, %v676
        %v701 = vpack.c.b16 %v679, %v677
        %v702 = vpack.c.b16 %v682, %v680
        %v703 = vpack.c.b16 %v683, %v681
        %v704 = vpack.c.b16 %v686, %v684
        %v705 = vpack.c.b16 %v687, %v685
        %v706 = vpack.c.b16 %v690, %v688
        %v707 = vpack.c.b16 %v691, %v689
        %724 = vmatprep.subr.bf16.mxu0 %v693
        %725 = vmatpush1.bf16.msra.mxu0 %v692
        %726 = vmatprep.subr.bf16.mxu0 %v695
        %727 = vmatpush1.bf16.msra.mxu0 %v694
        %728 = vmatprep.subr.bf16.mxu0 %v697
        %729 = vmatpush1.bf16.msra.mxu0 %v696
        %730 = vmatprep.subr.bf16.mxu0 %v699
        %731 = vmatpush1.bf16.msra.mxu0 %v698
        %732 = vmatprep.subr.bf16.mxu0 %v701
        %733 = vmatpush1.bf16.msra.mxu0 %v700
        %734 = vmatprep.subr.bf16.mxu0 %v703
        %735 = vmatpush1.bf16.msra.mxu0 %v702
        %736 = vmatprep.subr.bf16.mxu0 %v705
        %737 = vmatpush1.bf16.msra.mxu0 %v704
        %738 = vmatprep.subr.bf16.mxu0 %v707
        %739 = vmatpush1.bf16.msra.mxu0 %v706
        %740 = vmatprep.subr.bf16.mxu0 0
        %741 = vmatpush1.bf16.msra.mxu0 0
        %742 = vmatprep.subr.bf16.mxu0 0
        %743 = vmatpush1.bf16.msra.mxu0 0
        %744 = vmatprep.subr.bf16.mxu0 0
        %745 = vmatpush1.bf16.msra.mxu0 0
        %746 = vmatprep.subr.bf16.mxu0 0
        %747 = vmatpush1.bf16.msra.mxu0 0
        %748 = vmatprep.subr.bf16.mxu0 0
        %749 = vmatpush1.bf16.msra.mxu0 0
        %750 = vmatprep.subr.bf16.mxu0 0
        %751 = vmatpush1.bf16.msra.mxu0 0
        %752 = vmatprep.subr.bf16.mxu0 0
        %753 = vmatpush1.bf16.msra.mxu0 0
        %754 = vmatprep.subr.bf16.mxu0 0
        %755 = vmatpush1.bf16.msra.mxu0 0
        %756 = vmatprep.mubr.bf16.mxu0 0
        %757 = vmatmul.mubr.bf16.gmra.mrb[0].mxu0 %v611
        %v758 = vpop.f32.mrb[0].mxu0
        %v759 = vadd.f32 0.0, %v758
        %v760 = vpop.f32.mrb[0].mxu0
        %v761 = vadd.f32 0.0, %v760
        %v762 = vpop.f32.mrb[0].mxu0
        %v763 = vpop.f32.mrb[0].mxu0
        %764 = vdwg.mxu0
        %v781 = vunpack.c.l.b16 %v612
        %v782 = vunpack.c.h.b16 %v612
        %v783 = vunpack.c.l.b16 %v613
        %v784 = vunpack.c.h.b16 %v613
        %v785 = vunpack.c.l.b16 %v614
        %v786 = vunpack.c.h.b16 %v614
        %v787 = vunpack.c.l.b16 %v615
        %v788 = vunpack.c.h.b16 %v615
        %v789 = vunpack.c.l.b16 %v616
        %v790 = vunpack.c.h.b16 %v616
        %v791 = vunpack.c.l.b16 %v617
        %v792 = vunpack.c.h.b16 %v617
        %v793 = vunpack.c.l.b16 %v618
        %v794 = vunpack.c.h.b16 %v618
        %v795 = vunpack.c.l.b16 %v619
        %v796 = vunpack.c.h.b16 %v619
        %v797 = vunpack.c.l.b16 %v620
        %v798 = vunpack.c.h.b16 %v620
        %v799 = vunpack.c.l.b16 %v621
        %v800 = vunpack.c.h.b16 %v621
        %v801 = vunpack.c.l.b16 %v622
        %v802 = vunpack.c.h.b16 %v622
        %v803 = vunpack.c.l.b16 %v623
        %v804 = vunpack.c.h.b16 %v623
        %v805 = vunpack.c.l.b16 %v624
        %v806 = vunpack.c.h.b16 %v624
        %v807 = vunpack.c.l.b16 %v625
        %v808 = vunpack.c.h.b16 %v625
        %v809 = vunpack.c.l.b16 %v626
        %v810 = vunpack.c.h.b16 %v626
        %v811 = vunpack.c.l.b16 %v627
        %v812 = vunpack.c.h.b16 %v627
        %v813 = vpack.c.b16 %v783, %v781
        %v814 = vpack.c.b16 %v784, %v782
        %v815 = vpack.c.b16 %v787, %v785
        %v816 = vpack.c.b16 %v788, %v786
        %v817 = vpack.c.b16 %v791, %v789
        %v818 = vpack.c.b16 %v792, %v790
        %v819 = vpack.c.b16 %v795, %v793
        %v820 = vpack.c.b16 %v796, %v794
        %v821 = vpack.c.b16 %v799, %v797
        %v822 = vpack.c.b16 %v800, %v798
        %v823 = vpack.c.b16 %v803, %v801
        %v824 = vpack.c.b16 %v804, %v802
        %v825 = vpack.c.b16 %v807, %v805
        %v826 = vpack.c.b16 %v808, %v806
        %v827 = vpack.c.b16 %v811, %v809
        %v828 = vpack.c.b16 %v812, %v810
        %845 = vmatprep.subr.bf16.mxu0 %v814
        %846 = vmatpush1.bf16.msra.mxu0 %v813
        %847 = vmatprep.subr.bf16.mxu0 %v816
        %848 = vmatpush1.bf16.msra.mxu0 %v815
        %849 = vmatprep.subr.bf16.mxu0 %v818
        %850 = vmatpush1.bf16.msra.mxu0 %v817
        %851 = vmatprep.subr.bf16.mxu0 %v820
        %852 = vmatpush1.bf16.msra.mxu0 %v819
        %853 = vmatprep.subr.bf16.mxu0 %v822
        %854 = vmatpush1.bf16.msra.mxu0 %v821
        %855 = vmatprep.subr.bf16.mxu0 %v824
        %856 = vmatpush1.bf16.msra.mxu0 %v823
        %857 = vmatprep.subr.bf16.mxu0 %v826
        %858 = vmatpush1.bf16.msra.mxu0 %v825
        %859 = vmatprep.subr.bf16.mxu0 %v828
        %860 = vmatpush1.bf16.msra.mxu0 %v827
        %861 = vmatprep.subr.bf16.mxu0 0
        %862 = vmatpush1.bf16.msra.mxu0 0
        %863 = vmatprep.subr.bf16.mxu0 0
        %864 = vmatpush1.bf16.msra.mxu0 0
        %865 = vmatprep.subr.bf16.mxu0 0
        %866 = vmatpush1.bf16.msra.mxu0 0
        %867 = vmatprep.subr.bf16.mxu0 0
        %868 = vmatpush1.bf16.msra.mxu0 0
        %869 = vmatprep.subr.bf16.mxu0 0
        %870 = vmatpush1.bf16.msra.mxu0 0
        %871 = vmatprep.subr.bf16.mxu0 0
        %872 = vmatpush1.bf16.msra.mxu0 0
        %873 = vmatprep.subr.bf16.mxu0 0
        %874 = vmatpush1.bf16.msra.mxu0 0
        %875 = vmatprep.subr.bf16.mxu0 0
        %876 = vmatpush1.bf16.msra.mxu0 0
        %877 = vmatprep.mubr.bf16.mxu0 0
        %878 = vmatmul.mubr.bf16.gmra.mrb[0].mxu0 %v610
        %v879 = vpop.f32.mrb[0].mxu0
        %v880 = vadd.f32 %v759, %v879
        %v881 = vpop.f32.mrb[0].mxu0
        %v882 = vadd.f32 %v761, %v881
        %v883 = vpop.f32.mrb[0].mxu0
        %v884 = vpop.f32.mrb[0].mxu0
        %885 = vdwg.mxu0
        %v886 = vld [vmem:[%s499] sm:$0xff]
        %v887 = vpack.c.bf16 %v886, %v886
        %v888 = vld [vmem:[#allocation13] sm:$0xff]
        %v889 = vld [vmem:[#allocation13 + $0x8] sm:$0xff]
        %v890 = vld [vmem:[#allocation13 + $0x10] sm:$0xff]
        %v891 = vld [vmem:[#allocation13 + $0x18] sm:$0xff]
        %v896 = vunpack.c.l.b16 %v888
        %v897 = vunpack.c.h.b16 %v888
        %v898 = vunpack.c.l.b16 %v889
        %v899 = vunpack.c.h.b16 %v889
        %v900 = vunpack.c.l.b16 %v890
        %v901 = vunpack.c.h.b16 %v890
        %v902 = vunpack.c.l.b16 %v891
        %v903 = vunpack.c.h.b16 %v891
        %v904 = vpack.c.b16 %v898, %v896
        %v905 = vpack.c.b16 %v899, %v897
        %v906 = vpack.c.b16 %v902, %v900
        %v907 = vpack.c.b16 %v903, %v901
        %vm912 = vcmask 261120
        %v914 = vsel %vm912, %v887, 0
        %916 = vmatprep.subr.bf16.mxu0 %v905
        %917 = vmatpush1.bf16.msra.mxu0 %v904
        %918 = vmatprep.subr.bf16.mxu0 %v907
        %919 = vmatpush1.bf16.msra.mxu0 %v906
        %920 = vmatprep.subr.bf16.mxu0 0
        %921 = vmatpush1.bf16.msra.mxu0 0
        %922 = vmatprep.subr.bf16.mxu0 0
        %923 = vmatpush1.bf16.msra.mxu0 0
        %924 = vmatprep.subr.bf16.mxu0 0
        %925 = vmatpush1.bf16.msra.mxu0 0
        %926 = vmatprep.subr.bf16.mxu0 0
        %927 = vmatpush1.bf16.msra.mxu0 0
        %928 = vmatprep.subr.bf16.mxu0 0
        %929 = vmatpush1.bf16.msra.mxu0 0
        %930 = vmatprep.subr.bf16.mxu0 0
        %931 = vmatpush1.bf16.msra.mxu0 0
        %932 = vmatprep.subr.bf16.mxu0 0
        %933 = vmatpush1.bf16.msra.mxu0 0
        %934 = vmatprep.subr.bf16.mxu0 0
        %935 = vmatpush1.bf16.msra.mxu0 0
        %936 = vmatprep.subr.bf16.mxu0 0
        %937 = vmatpush1.bf16.msra.mxu0 0
        %938 = vmatprep.subr.bf16.mxu0 0
        %939 = vmatpush1.bf16.msra.mxu0 0
        %940 = vmatprep.subr.bf16.mxu0 0
        %941 = vmatpush1.bf16.msra.mxu0 0
        %942 = vmatprep.subr.bf16.mxu0 0
        %943 = vmatpush1.bf16.msra.mxu0 0
        %944 = vmatprep.subr.bf16.mxu0 0
        %945 = vmatpush1.bf16.msra.mxu0 0
        %946 = vmatprep.subr.bf16.mxu0 0
        %947 = vmatpush1.bf16.msra.mxu0 0
        %948 = vmatprep.mubr.bf16.mxu0 0
        %949 = vmatmul.mubr.bf16.gmra.mrb[0].mxu0 %v914
        %v950 = vpop.f32.mrb[0].mxu0
        %v951 = vadd.f32 0.0, %v950
        %v952 = vpop.f32.mrb[0].mxu0
        %v953 = vadd.f32 0.0, %v952
        %v954 = vpop.f32.mrb[0].mxu0
        %v955 = vpop.f32.mrb[0].mxu0
        %956 = vdwg.mxu0
        %v957 = vadd.f32 %v880, %v951
        %v958 = vadd.f32 %v882, %v953
        %v959 = vld [vmem:[%s508] sm:$0x3]
        %v961 = vlaneseq
        %v962 = vshrl.u32 %v961, 7
        %v963 = vsub.s32 0, %v962
        %v964 = vrot.slane %v959, %v963
        %v965 = vlaneseq
        %v966 = vshrl.u32 %v965, 7
        %v967 = vsub.s32 1, %v966
        %v968 = vrot.slane %v959, %v967
        %v971 = vpack.c.bf16 %v964, %v964
        %v972 = vpack.c.bf16 %v968, %v968
        %v973 = vld [vmem:[#allocation14] sm:$0xff]
        %v974 = vld [vmem:[#allocation14 + $0x8] sm:$0xff]
        %v975 = vld [vmem:[#allocation14 + $0x10] sm:$0xff]
        %v976 = vld [vmem:[#allocation14 + $0x18] sm:$0xff]
        %v977 = vld [vmem:[#allocation14 + $0x20] sm:$0xff]
        %v978 = vld [vmem:[#allocation14 + $0x28] sm:$0xff]
        %v979 = vld [vmem:[#allocation14 + $0x30] sm:$0xff]
        %v980 = vld [vmem:[#allocation14 + $0x38] sm:$0xff]
        %v981 = vld [vmem:[#allocation14 + $0x40] sm:$0xff]
        %v982 = vld [vmem:[#allocation14 + $0x48] sm:$0xff]
        %v983 = vld [vmem:[#allocation14 + $0x50] sm:$0xff]
        %v984 = vld [vmem:[#allocation14 + $0x58] sm:$0xff]
        %v985 = vld [vmem:[#allocation14 + $0x60] sm:$0xff]
        %v986 = vld [vmem:[#allocation14 + $0x68] sm:$0xff]
        %v987 = vld [vmem:[#allocation14 + $0x70] sm:$0xff]
        %v988 = vld [vmem:[#allocation14 + $0x78] sm:$0xff]
        %v989 = vld [vmem:[#allocation14 + $0x80] sm:$0xff]
        %v990 = vld [vmem:[#allocation14 + $0x88] sm:$0xff]
        %v991 = vld [vmem:[#allocation14 + $0x90] sm:$0xff]
        %v992 = vld [vmem:[#allocation14 + $0x98] sm:$0xff]
        %v993 = vld [vmem:[#allocation14 + $0xa0] sm:$0xff]
        %v994 = vld [vmem:[#allocation14 + $0xa8] sm:$0xff]
        %v995 = vld [vmem:[#allocation14 + $0xb0] sm:$0xff]
        %v996 = vld [vmem:[#allocation14 + $0xb8] sm:$0xff]
        %v997 = vld [vmem:[#allocation14 + $0xc0] sm:$0xff]
        %v998 = vld [vmem:[#allocation14 + $0xc8] sm:$0xff]
        %v999 = vld [vmem:[#allocation14 + $0xd0] sm:$0xff]
        %v1000 = vld [vmem:[#allocation14 + $0xd8] sm:$0xff]
        %v1001 = vld [vmem:[#allocation14 + $0xe0] sm:$0xff]
        %v1002 = vld [vmem:[#allocation14 + $0xe8] sm:$0xff]
        %v1003 = vld [vmem:[#allocation14 + $0xf0] sm:$0xff]
        %v1004 = vld [vmem:[#allocation14 + $0xf8] sm:$0xff]
        %v1037 = vunpack.c.l.b16 %v973
        %v1038 = vunpack.c.h.b16 %v973
        %v1039 = vunpack.c.l.b16 %v974
        %v1040 = vunpack.c.h.b16 %v974
        %v1041 = vunpack.c.l.b16 %v975
        %v1042 = vunpack.c.h.b16 %v975
        %v1043 = vunpack.c.l.b16 %v976
        %v1044 = vunpack.c.h.b16 %v976
        %v1045 = vunpack.c.l.b16 %v977
        %v1046 = vunpack.c.h.b16 %v977
        %v1047 = vunpack.c.l.b16 %v978
        %v1048 = vunpack.c.h.b16 %v978
        %v1049 = vunpack.c.l.b16 %v979
        %v1050 = vunpack.c.h.b16 %v979
        %v1051 = vunpack.c.l.b16 %v980
        %v1052 = vunpack.c.h.b16 %v980
        %v1053 = vunpack.c.l.b16 %v981
        %v1054 = vunpack.c.h.b16 %v981
        %v1055 = vunpack.c.l.b16 %v982
        %v1056 = vunpack.c.h.b16 %v982
        %v1057 = vunpack.c.l.b16 %v983
        %v1058 = vunpack.c.h.b16 %v983
        %v1059 = vunpack.c.l.b16 %v984
        %v1060 = vunpack.c.h.b16 %v984
        %v1061 = vunpack.c.l.b16 %v985
        %v1062 = vunpack.c.h.b16 %v985
        %v1063 = vunpack.c.l.b16 %v986
        %v1064 = vunpack.c.h.b16 %v986
        %v1065 = vunpack.c.l.b16 %v987
        %v1066 = vunpack.c.h.b16 %v987
        %v1067 = vunpack.c.l.b16 %v988
        %v1068 = vunpack.c.h.b16 %v988
        %v1069 = vunpack.c.l.b16 %v989
        %v1070 = vunpack.c.h.b16 %v989
        %v1071 = vunpack.c.l.b16 %v990
        %v1072 = vunpack.c.h.b16 %v990
        %v1073 = vunpack.c.l.b16 %v991
        %v1074 = vunpack.c.h.b16 %v991
        %v1075 = vunpack.c.l.b16 %v992
        %v1076 = vunpack.c.h.b16 %v992
        %v1077 = vunpack.c.l.b16 %v993
        %v1078 = vunpack.c.h.b16 %v993
        %v1079 = vunpack.c.l.b16 %v994
        %v1080 = vunpack.c.h.b16 %v994
        %v1081 = vunpack.c.l.b16 %v995
        %v1082 = vunpack.c.h.b16 %v995
        %v1083 = vunpack.c.l.b16 %v996
        %v1084 = vunpack.c.h.b16 %v996
        %v1085 = vunpack.c.l.b16 %v997
        %v1086 = vunpack.c.h.b16 %v997
        %v1087 = vunpack.c.l.b16 %v998
        %v1088 = vunpack.c.h.b16 %v998
        %v1089 = vunpack.c.l.b16 %v999
        %v1090 = vunpack.c.h.b16 %v999
        %v1091 = vunpack.c.l.b16 %v1000
        %v1092 = vunpack.c.h.b16 %v1000
        %v1093 = vunpack.c.l.b16 %v1001
        %v1094 = vunpack.c.h.b16 %v1001
        %v1095 = vunpack.c.l.b16 %v1002
        %v1096 = vunpack.c.h.b16 %v1002
        %v1097 = vunpack.c.l.b16 %v1003
        %v1098 = vunpack.c.h.b16 %v1003
        %v1099 = vunpack.c.l.b16 %v1004
        %v1100 = vunpack.c.h.b16 %v1004
        %v1101 = vpack.c.b16 %v1039, %v1037
        %v1102 = vpack.c.b16 %v1040, %v1038
        %v1103 = vpack.c.b16 %v1043, %v1041
        %v1104 = vpack.c.b16 %v1044, %v1042
        %v1105 = vpack.c.b16 %v1047, %v1045
        %v1106 = vpack.c.b16 %v1048, %v1046
        %v1107 = vpack.c.b16 %v1051, %v1049
        %v1108 = vpack.c.b16 %v1052, %v1050
        %v1109 = vpack.c.b16 %v1055, %v1053
        %v1110 = vpack.c.b16 %v1056, %v1054
        %v1111 = vpack.c.b16 %v1059, %v1057
        %v1112 = vpack.c.b16 %v1060, %v1058
        %v1113 = vpack.c.b16 %v1063, %v1061
        %v1114 = vpack.c.b16 %v1064, %v1062
        %v1115 = vpack.c.b16 %v1067, %v1065
        %v1116 = vpack.c.b16 %v1068, %v1066
        %v1117 = vpack.c.b16 %v1071, %v1069
        %v1118 = vpack.c.b16 %v1072, %v1070
        %v1119 = vpack.c.b16 %v1075, %v1073
        %v1120 = vpack.c.b16 %v1076, %v1074
        %v1121 = vpack.c.b16 %v1079, %v1077
        %v1122 = vpack.c.b16 %v1080, %v1078
        %v1123 = vpack.c.b16 %v1083, %v1081
        %v1124 = vpack.c.b16 %v1084, %v1082
        %v1125 = vpack.c.b16 %v1087, %v1085
        %v1126 = vpack.c.b16 %v1088, %v1086
        %v1127 = vpack.c.b16 %v1091, %v1089
        %v1128 = vpack.c.b16 %v1092, %v1090
        %v1129 = vpack.c.b16 %v1095, %v1093
        %v1130 = vpack.c.b16 %v1096, %v1094
        %v1131 = vpack.c.b16 %v1099, %v1097
        %v1132 = vpack.c.b16 %v1100, %v1098
        %1165 = vmatprep.subr.bf16.mxu0 %v1102
        %1166 = vmatpush1.bf16.msra.mxu0 %v1101
        %1167 = vmatprep.subr.bf16.mxu0 %v1104
        %1168 = vmatpush1.bf16.msra.mxu0 %v1103
        %1169 = vmatprep.subr.bf16.mxu0 %v1106
        %1170 = vmatpush1.bf16.msra.mxu0 %v1105
        %1171 = vmatprep.subr.bf16.mxu0 %v1108
        %1172 = vmatpush1.bf16.msra.mxu0 %v1107
        %1173 = vmatprep.subr.bf16.mxu0 %v1110
        %1174 = vmatpush1.bf16.msra.mxu0 %v1109
        %1175 = vmatprep.subr.bf16.mxu0 %v1112
        %1176 = vmatpush1.bf16.msra.mxu0 %v1111
        %1177 = vmatprep.subr.bf16.mxu0 %v1114
        %1178 = vmatpush1.bf16.msra.mxu0 %v1113
        %1179 = vmatprep.subr.bf16.mxu0 %v1116
        %1180 = vmatpush1.bf16.msra.mxu0 %v1115
        %1181 = vmatprep.subr.bf16.mxu0 %v1118
        %1182 = vmatpush1.bf16.msra.mxu0 %v1117
        %1183 = vmatprep.subr.bf16.mxu0 %v1120
        %1184 = vmatpush1.bf16.msra.mxu0 %v1119
        %1185 = vmatprep.subr.bf16.mxu0 %v1122
        %1186 = vmatpush1.bf16.msra.mxu0 %v1121
        %1187 = vmatprep.subr.bf16.mxu0 %v1124
        %1188 = vmatpush1.bf16.msra.mxu0 %v1123
        %1189 = vmatprep.subr.bf16.mxu0 %v1126
        %1190 = vmatpush1.bf16.msra.mxu0 %v1125
        %1191 = vmatprep.subr.bf16.mxu0 %v1128
        %1192 = vmatpush1.bf16.msra.mxu0 %v1127
        %1193 = vmatprep.subr.bf16.mxu0 %v1130
        %1194 = vmatpush1.bf16.msra.mxu0 %v1129
        %1195 = vmatprep.subr.bf16.mxu0 %v1132
        %1196 = vmatpush1.bf16.msra.mxu0 %v1131
        %1197 = vmatprep.mubr.bf16.mxu0 %v972
        %1198 = vmatmul.mubr.bf16.gmra.mrb[0].mxu0 %v971
        %v1199 = vpop.f32.mrb[0].mxu0
        %v1200 = vadd.f32 0.0, %v1199
        %v1201 = vpop.f32.mrb[0].mxu0
        %v1202 = vadd.f32 0.0, %v1201
        %v1203 = vpop.f32.mrb[0].mxu0
        %v1204 = vpop.f32.mrb[0].mxu0
        %1205 = vdwg.mxu0
        %v1206 = vlaneseq
        %v1207 = vshrl.u32 %v1206, 7
        %v1208 = vsub.s32 0, %v1207
        %v1209 = vrot.slane %v1200, %v1208
        %v1210 = vlaneseq
        %v1211 = vshrl.u32 %v1210, 7
        %v1212 = vsub.s32 0, %v1211
        %v1213 = vrot.slane %v1202, %v1212
        %v1214 = vadd.f32 %v957, %v1209
        %v1215 = vadd.f32 %v958, %v1213
        %v1216 = vld [vmem:[#allocation17] sm:$0x3]
        %v1218 = vlaneseq
        %v1219 = vshrl.u32 %v1218, 7
        %v1220 = vsub.s32 0, %v1219
        %v1221 = vrot.slane %v1216, %v1220
        %v1222 = vlaneseq
        %v1223 = vshrl.u32 %v1222, 7
        %v1224 = vsub.s32 1, %v1223
        %v1225 = vrot.slane %v1216, %v1224
        %v1228 = vadd.f32 %v1214, %v1221
        %v1229 = vadd.f32 %v1215, %v1225
        %v1230 = vmax.f32 %v1228, 0.0
        %v1231 = vmax.f32 %v1229, 0.0
        %v1232 = vpack.c.bf16 %v1230, %v1230
        %v1233 = vpack.c.bf16 %v1231, %v1231
        %v1234 = vld [vmem:[#allocation16] sm:$0xf]
        %v1235 = vld [vmem:[#allocation16 + $0x4] sm:$0xf]
        %v1236 = vld [vmem:[#allocation16 + $0x8] sm:$0xf]
        %v1237 = vld [vmem:[#allocation16 + $0xc] sm:$0xf]
        %v1238 = vld [vmem:[#allocation16 + $0x10] sm:$0xf]
        %v1239 = vld [vmem:[#allocation16 + $0x14] sm:$0xf]
        %v1240 = vld [vmem:[#allocation16 + $0x18] sm:$0xf]
        %v1241 = vld [vmem:[#allocation16 + $0x1c] sm:$0xf]
        %v1242 = vld [vmem:[#allocation16 + $0x20] sm:$0xf]
        %v1243 = vld [vmem:[#allocation16 + $0x24] sm:$0xf]
        %v1244 = vld [vmem:[#allocation16 + $0x28] sm:$0xf]
        %v1245 = vld [vmem:[#allocation16 + $0x2c] sm:$0xf]
        %v1246 = vld [vmem:[#allocation16 + $0x30] sm:$0xf]
        %v1247 = vld [vmem:[#allocation16 + $0x34] sm:$0xf]
        %v1248 = vld [vmem:[#allocation16 + $0x38] sm:$0xf]
        %v1249 = vld [vmem:[#allocation16 + $0x3c] sm:$0xf]
        %v1250 = vld [vmem:[#allocation16 + $0x40] sm:$0xf]
        %v1251 = vld [vmem:[#allocation16 + $0x44] sm:$0xf]
        %v1252 = vld [vmem:[#allocation16 + $0x48] sm:$0xf]
        %v1253 = vld [vmem:[#allocation16 + $0x4c] sm:$0xf]
        %v1254 = vld [vmem:[#allocation16 + $0x50] sm:$0xf]
        %v1255 = vld [vmem:[#allocation16 + $0x54] sm:$0xf]
        %v1256 = vld [vmem:[#allocation16 + $0x58] sm:$0xf]
        %v1257 = vld [vmem:[#allocation16 + $0x5c] sm:$0xf]
        %v1258 = vld [vmem:[#allocation16 + $0x60] sm:$0xf]
        %v1259 = vld [vmem:[#allocation16 + $0x64] sm:$0xf]
        %v1260 = vld [vmem:[#allocation16 + $0x68] sm:$0xf]
        %v1261 = vld [vmem:[#allocation16 + $0x6c] sm:$0xf]
        %v1262 = vld [vmem:[#allocation16 + $0x70] sm:$0xf]
        %v1263 = vld [vmem:[#allocation16 + $0x74] sm:$0xf]
        %v1264 = vld [vmem:[#allocation16 + $0x78] sm:$0xf]
        %v1265 = vld [vmem:[#allocation16 + $0x7c] sm:$0xf]
        %v1266 = vld [vmem:[#allocation19] sm:$0x1]
        %v1268 = vlaneseq
        %v1269 = vshrl.u32 %v1268, 7
        %v1270 = vsub.s32 0, %v1269
        %v1271 = vrot.slane %v1266, %v1270
        %v1305 = vunpack.c.l.b16 %v1234
        %v1306 = vunpack.c.l.b16 %v1235
        %v1307 = vunpack.c.l.b16 %v1236
        %v1308 = vunpack.c.l.b16 %v1237
        %v1309 = vunpack.c.l.b16 %v1238
        %v1310 = vunpack.c.l.b16 %v1239
        %v1311 = vunpack.c.l.b16 %v1240
        %v1312 = vunpack.c.l.b16 %v1241
        %v1313 = vunpack.c.l.b16 %v1242
        %v1314 = vunpack.c.l.b16 %v1243
        %v1315 = vunpack.c.l.b16 %v1244
        %v1316 = vunpack.c.l.b16 %v1245
        %v1317 = vunpack.c.l.b16 %v1246
        %v1318 = vunpack.c.l.b16 %v1247
        %v1319 = vunpack.c.l.b16 %v1248
        %v1320 = vunpack.c.l.b16 %v1249
        %v1321 = vunpack.c.l.b16 %v1250
        %v1322 = vunpack.c.l.b16 %v1251
        %v1323 = vunpack.c.l.b16 %v1252
        %v1324 = vunpack.c.l.b16 %v1253
        %v1325 = vunpack.c.l.b16 %v1254
        %v1326 = vunpack.c.l.b16 %v1255
        %v1327 = vunpack.c.l.b16 %v1256
        %v1328 = vunpack.c.l.b16 %v1257
        %v1329 = vunpack.c.l.b16 %v1258
        %v1330 = vunpack.c.l.b16 %v1259
        %v1331 = vunpack.c.l.b16 %v1260
        %v1332 = vunpack.c.l.b16 %v1261
        %v1333 = vunpack.c.l.b16 %v1262
        %v1334 = vunpack.c.l.b16 %v1263
        %v1335 = vunpack.c.l.b16 %v1264
        %v1336 = vunpack.c.l.b16 %v1265
        %v1337 = vpack.c.b16 %v1306, %v1305
        %v1338 = vpack.c.b16 %v1308, %v1307
        %v1339 = vpack.c.b16 %v1310, %v1309
        %v1340 = vpack.c.b16 %v1312, %v1311
        %v1341 = vpack.c.b16 %v1314, %v1313
        %v1342 = vpack.c.b16 %v1316, %v1315
        %v1343 = vpack.c.b16 %v1318, %v1317
        %v1344 = vpack.c.b16 %v1320, %v1319
        %v1345 = vpack.c.b16 %v1322, %v1321
        %v1346 = vpack.c.b16 %v1324, %v1323
        %v1347 = vpack.c.b16 %v1326, %v1325
        %v1348 = vpack.c.b16 %v1328, %v1327
        %v1349 = vpack.c.b16 %v1330, %v1329
        %v1350 = vpack.c.b16 %v1332, %v1331
        %v1351 = vpack.c.b16 %v1334, %v1333
        %v1352 = vpack.c.b16 %v1336, %v1335
        %1369 = vmatprep.subr.bf16.mxu0 0
        %1370 = vmatpush1.bf16.msra.mxu0 %v1337
        %1371 = vmatprep.subr.bf16.mxu0 0
        %1372 = vmatpush1.bf16.msra.mxu0 %v1338
        %1373 = vmatprep.subr.bf16.mxu0 0
        %1374 = vmatpush1.bf16.msra.mxu0 %v1339
        %1375 = vmatprep.subr.bf16.mxu0 0
        %1376 = vmatpush1.bf16.msra.mxu0 %v1340
        %1377 = vmatprep.subr.bf16.mxu0 0
        %1378 = vmatpush1.bf16.msra.mxu0 %v1341
        %1379 = vmatprep.subr.bf16.mxu0 0
        %1380 = vmatpush1.bf16.msra.mxu0 %v1342
        %1381 = vmatprep.subr.bf16.mxu0 0
        %1382 = vmatpush1.bf16.msra.mxu0 %v1343
        %1383 = vmatprep.subr.bf16.mxu0 0
        %1384 = vmatpush1.bf16.msra.mxu0 %v1344
        %1385 = vmatprep.subr.bf16.mxu0 0
        %1386 = vmatpush1.bf16.msra.mxu0 %v1345
        %1387 = vmatprep.subr.bf16.mxu0 0
        %1388 = vmatpush1.bf16.msra.mxu0 %v1346
        %1389 = vmatprep.subr.bf16.mxu0 0
        %1390 = vmatpush1.bf16.msra.mxu0 %v1347
        %1391 = vmatprep.subr.bf16.mxu0 0
        %1392 = vmatpush1.bf16.msra.mxu0 %v1348
        %1393 = vmatprep.subr.bf16.mxu0 0
        %1394 = vmatpush1.bf16.msra.mxu0 %v1349
        %1395 = vmatprep.subr.bf16.mxu0 0
        %1396 = vmatpush1.bf16.msra.mxu0 %v1350
        %1397 = vmatprep.subr.bf16.mxu0 0
        %1398 = vmatpush1.bf16.msra.mxu0 %v1351
        %1399 = vmatprep.subr.bf16.mxu0 0
        %1400 = vmatpush1.bf16.msra.mxu0 %v1352
        %1401 = vmatprep.mubr.bf16.mxu0 %v1233
        %1402 = vmatmul.mubr.bf16.gmra.mrb[0].mxu0 %v1232
        %v1403 = vpop.f32.mrb[0].mxu0
        %v1404 = vadd.f32 %v1271, %v1403
        %v1405 = vpop.f32.mrb[0].mxu0
        %v1406 = vpop.f32.mrb[0].mxu0
        %v1407 = vpop.f32.mrb[0].mxu0
        %1408 = vdwg.mxu0
        %1409 = vst [vmem:[%s607] sm:$0xff] %v1404
        %s1410 = sand.u32 %s296, 1
        %s1411 = scalar_lea.sflag [#allocation4], %s1410
        %s1412 = sand.u32 %s296, 1
        %s1413 = smul.addr %s1412, 8
        %s1414 = scalar_lea.vmem [#allocation20], %s1413
        // Predicated region
        $region109: #{edge_mlp.1} parent=63 // pred_check
          %p1415 = pneg %p306
        $region110: #{edge_mlp.1} parent=63 // pred_check_branch
          %1417 = sbr.rel (%p1415) target = $region112
        $region111: #{edge_mlp.1} parent=63 // pred_region
          %s1419 = ssub.s32 128, 128
          %1420 = vsyncadd %s1411, %s1419
          %s1421 = smul.addr %s37, 128
          %s1422 = scalar_lea.hbm %s11, %s1421
          %s1424 = sshll.u32 %s1414, 4
          %s1425 = int_to_ptr.vmem [resolvable:$true] %s1424
          %1427 = dma.vmem_to_hbm [thread:$0]  %s1425, 128, %s1422, %s1411
        $region112: #{edge_mlp.1} parent=63 // pred_fallthru
          _
      $region64: #{edge_mlp.1} parent=5 // pred_fallthru
        _
      %p1428 = scmp.le.s32.totalorder 2, %s32
      // Predicated region
      $region113: #{edge_mlp.1} parent=5 // pred_check
        %p1429 = pneg %p1428
      $region114: #{edge_mlp.1} parent=5 // pred_check_branch
        %1431 = sbr.rel (%p1429) target = $region116
      $region115: #{edge_mlp.1} parent=5 // pred_region
        %s1432 = ssub.s32 %s32, 2
        // Predicated region
        $region117: #{edge_mlp.1} parent=115 // pred_check
          %p1433 = pneg %p312
        $region118: #{edge_mlp.1} parent=115 // pred_check_branch
          %1435 = sbr.rel (%p1433) target = $region120
        $region119: #{edge_mlp.1} parent=115 // pred_region
          %s1436 = sand.u32 %s297, 1
          %s1437 = scalar_lea.sflag [#allocation4], %s1436
          %s1438 = sand.u32 %s297, 1
          %s1439 = smul.addr %s1438, 8
          %s1440 = scalar_lea.vmem [#allocation20], %s1439
          %1441 = dma.done %s1437, 128
        $region120: #{edge_mlp.1} parent=115 // pred_fallthru
          _
      $region116: #{edge_mlp.1} parent=5 // pred_fallthru
        _
    $region6: #{edge_mlp.1} parent=1 // loop_footer
      %s36 = sadd.s32 1, %s32
    $region7: #{edge_mlp.1} parent=1 // loop_footer_branch
      %31 = sbr.rel target = $region3
    $region8: #{edge_mlp.1} parent=1 // loop_exit
      _
    %1442 = vsyncpa [#allocation3], 1
    %s1443 = scalar_lea.sflag [#allocation3], 1
    %1444 = vsyncpa %s1443, 1
    %1445 = vsyncpa [#allocation6], 1
    %s1446 = scalar_lea.sflag [#allocation6], 1
    %1447 = vsyncpa %s1446, 1
    %1448 = vsyncpa [#allocation9], 1
    %s1449 = scalar_lea.sflag [#allocation9], 1
    %1450 = vsyncpa %s1449, 1
    %1451 = vsyncpa [#allocation12], 1
    %1452 = vsyncpa [#allocation15], 1
    %1453 = vsyncpa [#allocation18], 1
    %1454 = vsyncpa [#allocation4], 1
    %s1455 = scalar_lea.sflag [#allocation4], 1
    %1456 = vsyncpa %s1455, 1

</llo_original>
